<compile_context>
chip_gen: v7x
topology: tpu7x:2x2x1
jax: 0.10.0
libtpu: 0.0.40
codegen_flags: <defaults>
</compile_context>

<pallas_src>
import math

import jax
import jax.numpy as jnp
from jax import lax
from jax.experimental import pallas as pl
from jax.experimental.pallas import tpu as pltpu


# ------------------------- config (small, synthetic) -------------------------
INPUT_DIM = 16
HIDDEN_DIM = 32
OUTPUT_DIM = 8
LAYER_NUM = 2           # number of hidden Linear layers
NORM = True
NORM_LAYERS = 2         # input_norm present; hidden i gets LayerNorm iff i < NORM_LAYERS-1
DROPOUT = 0.0           # eval mode / no dropout
BATCH = 256
LANE = 128              # TPU lane width; packed bias/LN vector is padded to this
LN_EPS = 1e-5

# static row offsets of the packed weight operand [W_in; W0; W1]
_W_IN_ROWS = INPUT_DIM                       # 16
_W0_OFF = _W_IN_ROWS                         # 16
_W1_OFF = _W0_OFF + HIDDEN_DIM               # 48
_WPACK_ROWS = _W1_OFF + HIDDEN_DIM           # 80


# ------------------------------ kernel helpers -------------------------------
def _layernorm(h, gamma, beta):
    mu = jnp.mean(h, axis=-1, keepdims=True)
    var = jnp.mean((h - mu) ** 2, axis=-1, keepdims=True)
    return (h - mu) * lax.rsqrt(var + LN_EPS) * gamma + beta


def _gelu_exact(x):
    # PyTorch nn.GELU() default: exact erf-based GELU (kept for parity).
    return 0.5 * x * (1.0 + lax.erf(x * (1.0 / math.sqrt(2.0))))


# --------------------------------- kernel ------------------------------------
def mlp_relu_kernel(x_ref, w_pack_ref, w_out_ref, vec_ref, o_ref):
    # Packed per-feature vectors: rows are
    #   0: b_in   1: ln_in gamma   2: ln_in beta
    #   3: b_h0   4: ln_0 gamma    5: ln_0 beta
    #   6: b_h1   7: b_out
    vec = vec_ref[...]                           # (8, 128)
    b_in = vec[0:1, :HIDDEN_DIM]
    g_in = vec[1:2, :HIDDEN_DIM]
    be_in = vec[2:3, :HIDDEN_DIM]
    b0 = vec[3:4, :HIDDEN_DIM]
    g0 = vec[4:5, :HIDDEN_DIM]
    be0 = vec[5:6, :HIDDEN_DIM]
    b1 = vec[6:7, :HIDDEN_DIM]
    b_out = vec[7:8, :OUTPUT_DIM]

    # Packed weights: static slices at 8-aligned row offsets (no layout copies).
    w_pack = w_pack_ref[...]                     # (80, 32)
    w_in = w_pack[0:_W0_OFF, :]                  # (16, 32)
    w0 = w_pack[_W0_OFF:_W1_OFF, :]              # (32, 32)
    w1 = w_pack[_W1_OFF:_WPACK_ROWS, :]          # (32, 32)

    x = x_ref[...]

    # input Linear + LayerNorm + GELU
    h = jnp.dot(x, w_in, preferred_element_type=jnp.float32) + b_in
    h = _layernorm(h, g_in, be_in)
    h = _gelu_exact(h)

    # hidden_0: Linear + LayerNorm (i=0 < NORM_LAYERS-1) + ReLU
    h = jnp.dot(h, w0, preferred_element_type=jnp.float32) + b0
    h = _layernorm(h, g0, be0)
    h = jnp.maximum(h, 0.0)

    # hidden_1: Linear + ReLU (no LayerNorm since i=1 >= NORM_LAYERS-1)
    h = jnp.dot(h, w1, preferred_element_type=jnp.float32) + b1
    h = jnp.maximum(h, 0.0)

    # output Linear, stored directly at the true OUTPUT_DIM width
    o_ref[...] = (jnp.dot(h, w_out_ref[...], preferred_element_type=jnp.float32)
                  + b_out).astype(o_ref.dtype)


# --------------------------------- wrapper -----------------------------------
def _pack_params(params):
    """Pack the logical (unpadded) params into the 3 kernel weight operands."""
    (w_in, b_in, g_in, be_in, w0, b0, g0, be0, w1, b1, w_out, b_out) = params

    def pad_lanes(v):
        return jnp.pad(v, ((0, 0), (0, LANE - v.shape[1])))

    vec_pack = jnp.concatenate(
        [pad_lanes(b_in), pad_lanes(g_in), pad_lanes(be_in),
         pad_lanes(b0), pad_lanes(g0), pad_lanes(be0),
         pad_lanes(b1), pad_lanes(b_out)], axis=0)          # (8, 128)
    w_pack = jnp.concatenate([w_in, w0, w1], axis=0)        # (80, 32)
    return w_pack, w_out, vec_pack


def mlp_relu_forward(x, params):
    B, _ = x.shape
    w_pack, w_out, vec_pack = _pack_params(params)

    def rep(shape):
        # full-array block, constant index_map -> fetched once, resident
        return pl.BlockSpec(shape, lambda i: (0, 0))

    in_specs = [
        pl.BlockSpec((B, INPUT_DIM), lambda i: (i, 0)),     # x (single tile)
        rep((_WPACK_ROWS, HIDDEN_DIM)),                     # packed [W_in; W0; W1]
        rep((HIDDEN_DIM, OUTPUT_DIM)),                      # W_out
        rep((8, LANE)),                                     # packed biases / LN params
    ]

    flops = 2 * B * (INPUT_DIM * HIDDEN_DIM
                     + HIDDEN_DIM * HIDDEN_DIM
                     + HIDDEN_DIM * HIDDEN_DIM
                     + HIDDEN_DIM * OUTPUT_DIM)
    bytes_accessed = 4 * (x.size + w_pack.size + w_out.size
                          + vec_pack.size + B * OUTPUT_DIM)
    cost = pl.CostEstimate(flops=flops,
                           transcendentals=B * HIDDEN_DIM,   # erf in the GELU
                           bytes_accessed=bytes_accessed)

    out = pl.pallas_call(
        mlp_relu_kernel,
        out_shape=jax.ShapeDtypeStruct((B, OUTPUT_DIM), jnp.float32),
        grid=(1,),                                          # single step: overhead-bound kernel
        in_specs=in_specs,
        out_specs=pl.BlockSpec((B, OUTPUT_DIM), lambda i: (i, 0)),
        compiler_params=pltpu.CompilerParams(
            dimension_semantics=("arbitrary",)),
        cost_estimate=cost,
    )(x, w_pack, w_out, vec_pack)

    return out


# --------------------------- parameter construction --------------------------
def make_params(key):
    ks = jax.random.split(key, 4)

    def linear(k, fan_in, fan_out):
        # PyTorch-style uniform init, stored as (in, out)
        bound = 1.0 / math.sqrt(fan_in)
        w = jax.random.uniform(k, (fan_in, fan_out), jnp.float32, -bound, bound)
        kb = jax.random.fold_in(k, 1)
        b = jax.random.uniform(kb, (1, fan_out), jnp.float32, -bound, bound)
        return w, b

    w_in, b_in = linear(ks[0], INPUT_DIM, HIDDEN_DIM)
    w0, b0 = linear(ks[1], HIDDEN_DIM, HIDDEN_DIM)
    w1, b1 = linear(ks[2], HIDDEN_DIM, HIDDEN_DIM)
    w_out, b_out = linear(ks[3], HIDDEN_DIM, OUTPUT_DIM)

    # LayerNorm params: PyTorch default init (gamma=1, beta=0)
    g_in = jnp.ones((1, HIDDEN_DIM), jnp.float32)
    be_in = jnp.zeros((1, HIDDEN_DIM), jnp.float32)
    g0 = jnp.ones((1, HIDDEN_DIM), jnp.float32)
    be0 = jnp.zeros((1, HIDDEN_DIM), jnp.float32)

    return (w_in, b_in, g_in, be_in,
            w0, b0, g0, be0,
            w1, b1,
            w_out, b_out)


# ------------------------------ pure-JAX reference ---------------------------
def reference_forward(x, params):
    (w_in, b_in, g_in, be_in, w0, b0, g0, be0, w1, b1, w_out, b_out) = params
    h = x @ w_in + b_in
    h = _layernorm(h, g_in, be_in)
    h = jax.nn.gelu(h, approximate=False)
    h = h @ w0 + b0
    h = _layernorm(h, g0, be0)
    h = jnp.maximum(h, 0.0)
    h = h @ w1 + b1
    h = jnp.maximum(h, 0.0)
    return h @ w_out + b_out


# ----------------------------------- main ------------------------------------
if __name__ == "__main__":
    key = jax.random.PRNGKey(0)
    kx, kp = jax.random.split(key)
    x = jax.random.normal(kx, (BATCH, INPUT_DIM), jnp.float32)
    params = make_params(kp)

    out = mlp_relu_forward(x, params)
    out = jax.block_until_ready(out)

    ref = reference_forward(x, params)
    assert out.shape == (BATCH, OUTPUT_DIM)
    assert jnp.allclose(out, ref, atol=1e-4, rtol=1e-4), "mismatch vs reference"

    print("KERNEL_OK")
</pallas_src>

<mosaic_0001>
module attributes {stable_mosaic.version = 11 : i64} {
  func.func @mlp_relu_kernel(%arg0: i32, %arg1: memref<256x16xf32, #tpu.memory_space<vmem>>, %arg2: memref<80x32xf32, #tpu.memory_space<vmem>>, %arg3: memref<32x8xf32, #tpu.memory_space<vmem>>, %arg4: memref<8x128xf32, #tpu.memory_space<vmem>>, %arg5: memref<256x8xf32, #tpu.memory_space<vmem>>) attributes {dimension_semantics = [#tpu.dimension_semantics<arbitrary>], iteration_bounds = array<i64: 1>, scalar_prefetch = 0 : i64, scratch_operands = 0 : i64, tpu.core_type = #tpu.core_type<tc>, window_params = [{transform_indices = @transform_0, window_bounds = array<i64: 256, 16>}, {pipeline_mode = #tpu.pipeline_mode<synchronous>, transform_indices = @transform_1, window_bounds = array<i64: 80, 32>}, {pipeline_mode = #tpu.pipeline_mode<synchronous>, transform_indices = @transform_2, window_bounds = array<i64: 32, 8>}, {pipeline_mode = #tpu.pipeline_mode<synchronous>, transform_indices = @transform_3, window_bounds = array<i64: 8, 128>}, {transform_indices = @transform_4, window_bounds = array<i64: 256, 8>}]} {
    %c0 = arith.constant 0 : index
    %c0_0 = arith.constant 0 : index
    %0 = vector.load %arg4[%c0, %c0_0] : memref<8x128xf32, #tpu.memory_space<vmem>>, vector<8x128xf32>
    %1 = vector.extract_strided_slice %0 {offsets = [0, 0], sizes = [1, 32], strides = [1, 1]} : vector<8x128xf32> to vector<1x32xf32>
    %2 = vector.extract_strided_slice %0 {offsets = [1, 0], sizes = [1, 32], strides = [1, 1]} : vector<8x128xf32> to vector<1x32xf32>
    %3 = vector.extract_strided_slice %0 {offsets = [2, 0], sizes = [1, 32], strides = [1, 1]} : vector<8x128xf32> to vector<1x32xf32>
    %4 = vector.extract_strided_slice %0 {offsets = [3, 0], sizes = [1, 32], strides = [1, 1]} : vector<8x128xf32> to vector<1x32xf32>
    %5 = vector.extract_strided_slice %0 {offsets = [4, 0], sizes = [1, 32], strides = [1, 1]} : vector<8x128xf32> to vector<1x32xf32>
    %6 = vector.extract_strided_slice %0 {offsets = [5, 0], sizes = [1, 32], strides = [1, 1]} : vector<8x128xf32> to vector<1x32xf32>
    %7 = vector.extract_strided_slice %0 {offsets = [6, 0], sizes = [1, 32], strides = [1, 1]} : vector<8x128xf32> to vector<1x32xf32>
    %8 = vector.extract_strided_slice %0 {offsets = [7, 0], sizes = [1, 8], strides = [1, 1]} : vector<8x128xf32> to vector<1x8xf32>
    %c0_1 = arith.constant 0 : index
    %c0_2 = arith.constant 0 : index
    %9 = vector.load %arg2[%c0_1, %c0_2] : memref<80x32xf32, #tpu.memory_space<vmem>>, vector<80x32xf32>
    %10 = vector.extract_strided_slice %9 {offsets = [0, 0], sizes = [16, 32], strides = [1, 1]} : vector<80x32xf32> to vector<16x32xf32>
    %11 = vector.extract_strided_slice %9 {offsets = [16, 0], sizes = [32, 32], strides = [1, 1]} : vector<80x32xf32> to vector<32x32xf32>
    %12 = vector.extract_strided_slice %9 {offsets = [48, 0], sizes = [32, 32], strides = [1, 1]} : vector<80x32xf32> to vector<32x32xf32>
    %c0_3 = arith.constant 0 : index
    %c0_4 = arith.constant 0 : index
    %13 = vector.load %arg1[%c0_3, %c0_4] : memref<256x16xf32, #tpu.memory_space<vmem>>, vector<256x16xf32>
    %cst = arith.constant dense<0.000000e+00> : vector<256x32xf32>
    %14 = tpu.matmul %13, %10, %cst {dimension_numbers = #tpu.dot_dimension_numbers<[1], [0], [0], [1], [0, 0, 1, 1], [], []>} : vector<256x16xf32>, vector<16x32xf32>, vector<256x32xf32> -> vector<256x32xf32>
    %15 = vector.broadcast %1 : vector<1x32xf32> to vector<256x32xf32>
    %16 = arith.addf %14, %15 : vector<256x32xf32>
    %cst_5 = arith.constant dense<0.000000e+00> : vector<256xf32>
    %17 = vector.multi_reduction <add>, %16, %cst_5 [1] : vector<256x32xf32> to vector<256xf32>
    %18 = vector.shape_cast %17 : vector<256xf32> to vector<256x1xf32>
    %cst_6 = arith.constant 3.200000e+01 : f32
    %19 = vector.broadcast %cst_6 : f32 to vector<256x1xf32>
    %20 = arith.divf %18, %19 : vector<256x1xf32>
    %21 = vector.broadcast %20 : vector<256x1xf32> to vector<256x32xf32>
    %22 = arith.subf %16, %21 : vector<256x32xf32>
    %23 = arith.mulf %22, %22 : vector<256x32xf32>
    %cst_7 = arith.constant dense<0.000000e+00> : vector<256xf32>
    %24 = vector.multi_reduction <add>, %23, %cst_7 [1] : vector<256x32xf32> to vector<256xf32>
    %25 = vector.shape_cast %24 : vector<256xf32> to vector<256x1xf32>
    %cst_8 = arith.constant 3.200000e+01 : f32
    %26 = vector.broadcast %cst_8 : f32 to vector<256x1xf32>
    %27 = arith.divf %25, %26 : vector<256x1xf32>
    %28 = vector.broadcast %20 : vector<256x1xf32> to vector<256x32xf32>
    %29 = arith.subf %16, %28 : vector<256x32xf32>
    %cst_9 = arith.constant 9.99999974E-6 : f32
    %30 = vector.broadcast %cst_9 : f32 to vector<256x1xf32>
    %31 = arith.addf %27, %30 : vector<256x1xf32>
    %32 = math.rsqrt %31 : vector<256x1xf32>
    %33 = vector.broadcast %32 : vector<256x1xf32> to vector<256x32xf32>
    %34 = arith.mulf %29, %33 : vector<256x32xf32>
    %35 = vector.broadcast %2 : vector<1x32xf32> to vector<256x32xf32>
    %36 = arith.mulf %34, %35 : vector<256x32xf32>
    %37 = vector.broadcast %3 : vector<1x32xf32> to vector<256x32xf32>
    %38 = arith.addf %36, %37 : vector<256x32xf32>
    %cst_10 = arith.constant 5.000000e-01 : f32
    %39 = vector.broadcast %cst_10 : f32 to vector<256x32xf32>
    %40 = arith.mulf %39, %38 : vector<256x32xf32>
    %cst_11 = arith.constant 0.707106769 : f32
    %41 = vector.broadcast %cst_11 : f32 to vector<256x32xf32>
    %42 = arith.mulf %38, %41 : vector<256x32xf32>
    %43 = math.erf %42 : vector<256x32xf32>
    %cst_12 = arith.constant 1.000000e+00 : f32
    %44 = vector.broadcast %cst_12 : f32 to vector<256x32xf32>
    %45 = arith.addf %44, %43 : vector<256x32xf32>
    %46 = arith.mulf %40, %45 : vector<256x32xf32>
    %cst_13 = arith.constant dense<0.000000e+00> : vector<256x32xf32>
    %47 = tpu.matmul %46, %11, %cst_13 {dimension_numbers = #tpu.dot_dimension_numbers<[1], [0], [0], [1], [0, 0, 1, 1], [], []>} : vector<256x32xf32>, vector<32x32xf32>, vector<256x32xf32> -> vector<256x32xf32>
    %48 = vector.broadcast %4 : vector<1x32xf32> to vector<256x32xf32>
    %49 = arith.addf %47, %48 : vector<256x32xf32>
    %cst_14 = arith.constant dense<0.000000e+00> : vector<256xf32>
    %50 = vector.multi_reduction <add>, %49, %cst_14 [1] : vector<256x32xf32> to vector<256xf32>
    %51 = vector.shape_cast %50 : vector<256xf32> to vector<256x1xf32>
    %cst_15 = arith.constant 3.200000e+01 : f32
    %52 = vector.broadcast %cst_15 : f32 to vector<256x1xf32>
    %53 = arith.divf %51, %52 : vector<256x1xf32>
    %54 = vector.broadcast %53 : vector<256x1xf32> to vector<256x32xf32>
    %55 = arith.subf %49, %54 : vector<256x32xf32>
    %56 = arith.mulf %55, %55 : vector<256x32xf32>
    %cst_16 = arith.constant dense<0.000000e+00> : vector<256xf32>
    %57 = vector.multi_reduction <add>, %56, %cst_16 [1] : vector<256x32xf32> to vector<256xf32>
    %58 = vector.shape_cast %57 : vector<256xf32> to vector<256x1xf32>
    %cst_17 = arith.constant 3.200000e+01 : f32
    %59 = vector.broadcast %cst_17 : f32 to vector<256x1xf32>
    %60 = arith.divf %58, %59 : vector<256x1xf32>
    %61 = vector.broadcast %53 : vector<256x1xf32> to vector<256x32xf32>
    %62 = arith.subf %49, %61 : vector<256x32xf32>
    %cst_18 = arith.constant 9.99999974E-6 : f32
    %63 = vector.broadcast %cst_18 : f32 to vector<256x1xf32>
    %64 = arith.addf %60, %63 : vector<256x1xf32>
    %65 = math.rsqrt %64 : vector<256x1xf32>
    %66 = vector.broadcast %65 : vector<256x1xf32> to vector<256x32xf32>
    %67 = arith.mulf %62, %66 : vector<256x32xf32>
    %68 = vector.broadcast %5 : vector<1x32xf32> to vector<256x32xf32>
    %69 = arith.mulf %67, %68 : vector<256x32xf32>
    %70 = vector.broadcast %6 : vector<1x32xf32> to vector<256x32xf32>
    %71 = arith.addf %69, %70 : vector<256x32xf32>
    %cst_19 = arith.constant 0.000000e+00 : f32
    %72 = vector.broadcast %cst_19 : f32 to vector<256x32xf32>
    %73 = arith.maximumf %71, %72 : vector<256x32xf32>
    %cst_20 = arith.constant dense<0.000000e+00> : vector<256x32xf32>
    %74 = tpu.matmul %73, %12, %cst_20 {dimension_numbers = #tpu.dot_dimension_numbers<[1], [0], [0], [1], [0, 0, 1, 1], [], []>} : vector<256x32xf32>, vector<32x32xf32>, vector<256x32xf32> -> vector<256x32xf32>
    %75 = vector.broadcast %7 : vector<1x32xf32> to vector<256x32xf32>
    %76 = arith.addf %74, %75 : vector<256x32xf32>
    %cst_21 = arith.constant 0.000000e+00 : f32
    %77 = vector.broadcast %cst_21 : f32 to vector<256x32xf32>
    %78 = arith.maximumf %76, %77 : vector<256x32xf32>
    %c0_22 = arith.constant 0 : index
    %c0_23 = arith.constant 0 : index
    %79 = vector.load %arg3[%c0_22, %c0_23] : memref<32x8xf32, #tpu.memory_space<vmem>>, vector<32x8xf32>
    %cst_24 = arith.constant dense<0.000000e+00> : vector<256x8xf32>
    %80 = tpu.matmul %78, %79, %cst_24 {dimension_numbers = #tpu.dot_dimension_numbers<[1], [0], [0], [1], [0, 0, 1, 1], [], []>} : vector<256x32xf32>, vector<32x8xf32>, vector<256x8xf32> -> vector<256x8xf32>
    %81 = vector.broadcast %8 : vector<1x8xf32> to vector<256x8xf32>
    %82 = arith.addf %80, %81 : vector<256x8xf32>
    %c0_25 = arith.constant 0 : index
    %c0_26 = arith.constant 0 : index
    %83 = vector.load %arg5[%c0_25, %c0_26] : memref<256x8xf32, #tpu.memory_space<vmem>>, vector<256x8xf32>
    tpu.vector_store %arg5[%c0_25, %c0_26], %82 {strides = array<i32>} : memref<256x8xf32, #tpu.memory_space<vmem>>, vector<256x8xf32>,
    return
  }
  func.func @transform_0(%arg0: i32) -> (i32, i32) {
    %c0_i32 = arith.constant 0 : i32
    %c0_i32_0 = arith.constant 0 : i32
    return %arg0, %c0_i32 : i32, i32
  }
  func.func @transform_1(%arg0: i32) -> (i32, i32) {
    %c0_i32 = arith.constant 0 : i32
    %c0_i32_0 = arith.constant 0 : i32
    %c0_i32_1 = arith.constant 0 : i32
    return %c0_i32, %c0_i32_0 : i32, i32
  }
  func.func @transform_2(%arg0: i32) -> (i32, i32) {
    %c0_i32 = arith.constant 0 : i32
    %c0_i32_0 = arith.constant 0 : i32
    %c0_i32_1 = arith.constant 0 : i32
    return %c0_i32, %c0_i32_0 : i32, i32
  }
  func.func @transform_3(%arg0: i32) -> (i32, i32) {
    %c0_i32 = arith.constant 0 : i32
    %c0_i32_0 = arith.constant 0 : i32
    %c0_i32_1 = arith.constant 0 : i32
    return %c0_i32, %c0_i32_0 : i32, i32
  }
  func.func @transform_4(%arg0: i32) -> (i32, i32) {
    %c0_i32 = arith.constant 0 : i32
    %c0_i32_0 = arith.constant 0 : i32
    return %arg0, %c0_i32 : i32, i32
  }
}

</mosaic_0001>

<llo_original>
// kernel: tpu_custom_call.1
$region0: #{tpu_custom_call.1}
  #allocation0 [shape = 'u32[]', space=smem, size = 0x4, offset = 0x4, fixed_abs, tag = 'smem constant byte address 0x4 - core index']
  #allocation1 [shape = 'u32[144,128]{1,0:T(1,128)}', space=vmem, size = 0x12000, scoped, tag = 'internal scratch']
  %s0 = inlined_call_operand.vmem [shape: f32[256,16], index: 0, kind: input, shape index: {}]
  %s1 = inlined_call_operand.vmem [shape: f32[80,32], index: 1, kind: input, shape index: {}]
  %s2 = inlined_call_operand.vmem [shape: f32[32,8], index: 2, kind: input, shape index: {}]
  %s3 = inlined_call_operand.vmem [shape: f32[8,128], index: 3, kind: input, shape index: {}]
  %s4 = inlined_call_operand.vmem [shape: f32[256,8], index: 4, kind: output, shape index: {}]
  %s5 = sld [smem:[#allocation0]]
  $region26: #{tpu_custom_call.1} parent=0
    _
  %s7 = ssub.s32 1, %s5
  %s8 = scalar_select 0, %s7, %s5
  // Predicated region
  $region2: #{tpu_custom_call.1} parent=0 // pred_check
    _
  $region3: #{tpu_custom_call.1} parent=0 // pred_check_branch
    %10 = sbr.rel (0) target = $region5
  $region4: #{tpu_custom_call.1} parent=0 // pred_region
    _
  $region5: #{tpu_custom_call.1} parent=0 // pred_fallthru
    _
  // Predicated region
  $region6: #{tpu_custom_call.1} parent=0 // pred_check
    _
  $region7: #{tpu_custom_call.1} parent=0 // pred_check_branch
    %12 = sbr.rel (0) target = $region9
  $region8: #{tpu_custom_call.1} parent=0 // pred_region
    _
  $region9: #{tpu_custom_call.1} parent=0 // pred_fallthru
    _
  // Predicated region
  $region10: #{tpu_custom_call.1} parent=0 // pred_check
    _
  $region11: #{tpu_custom_call.1} parent=0 // pred_check_branch
    %14 = sbr.rel (0) target = $region13
  $region12: #{tpu_custom_call.1} parent=0 // pred_region
    _
  $region13: #{tpu_custom_call.1} parent=0 // pred_fallthru
    _
  // Predicated region
  $region14: #{tpu_custom_call.1} parent=0 // pred_check
    _
  $region15: #{tpu_custom_call.1} parent=0 // pred_check_branch
    %16 = sbr.rel (0) target = $region17
  $region16: #{tpu_custom_call.1} parent=0 // pred_region
    _
  $region17: #{tpu_custom_call.1} parent=0 // pred_fallthru
    _
  %v17 = vld [vmem:[%s3] sm:$0xff]
  %v18 = vld [vmem:[%s1] sm:$0xff]
  %v19 = vld [vmem:[%s1 + $0x8] sm:$0xff]
  %v20 = vld [vmem:[%s1 + $0x10] sm:$0xff]
  %v21 = vld [vmem:[%s1 + $0x18] sm:$0xff]
  %v22 = vld [vmem:[%s1 + $0x20] sm:$0xff]
  %v23 = vld [vmem:[%s1 + $0x28] sm:$0xff]
  %v24 = vld [vmem:[%s1 + $0x30] sm:$0xff]
  %v25 = vld [vmem:[%s1 + $0x38] sm:$0xff]
  %v26 = vld [vmem:[%s1 + $0x40] sm:$0xff]
  %v27 = vld [vmem:[%s1 + $0x48] sm:$0xff]
  %v28 = vld [vmem:[%s0] sm:$0xff]
  %v29 = vld [vmem:[%s0 + $0x8] sm:$0xff]
  %v30 = vld [vmem:[%s0 + $0x10] sm:$0xff]
  %v31 = vld [vmem:[%s0 + $0x18] sm:$0xff]
  %v32 = vld [vmem:[%s0 + $0x20] sm:$0xff]
  %v33 = vld [vmem:[%s0 + $0x28] sm:$0xff]
  %v34 = vld [vmem:[%s0 + $0x30] sm:$0xff]
  %v35 = vld [vmem:[%s0 + $0x38] sm:$0xff]
  %v36 = vld [vmem:[%s0 + $0x40] sm:$0xff]
  %v37 = vld [vmem:[%s0 + $0x48] sm:$0xff]
  %v38 = vld [vmem:[%s0 + $0x50] sm:$0xff]
  %v39 = vld [vmem:[%s0 + $0x58] sm:$0xff]
  %v40 = vld [vmem:[%s0 + $0x60] sm:$0xff]
  %v41 = vld [vmem:[%s0 + $0x68] sm:$0xff]
  %v42 = vld [vmem:[%s0 + $0x70] sm:$0xff]
  %v43 = vld [vmem:[%s0 + $0x78] sm:$0xff]
  %v44 = vld [vmem:[%s0 + $0x80] sm:$0xff]
  %v45 = vld [vmem:[%s0 + $0x88] sm:$0xff]
  %v46 = vld [vmem:[%s0 + $0x90] sm:$0xff]
  %v47 = vld [vmem:[%s0 + $0x98] sm:$0xff]
  %v48 = vld [vmem:[%s0 + $0xa0] sm:$0xff]
  %v49 = vld [vmem:[%s0 + $0xa8] sm:$0xff]
  %v50 = vld [vmem:[%s0 + $0xb0] sm:$0xff]
  %v51 = vld [vmem:[%s0 + $0xb8] sm:$0xff]
  %v52 = vld [vmem:[%s0 + $0xc0] sm:$0xff]
  %v53 = vld [vmem:[%s0 + $0xc8] sm:$0xff]
  %v54 = vld [vmem:[%s0 + $0xd0] sm:$0xff]
  %v55 = vld [vmem:[%s0 + $0xd8] sm:$0xff]
  %v56 = vld [vmem:[%s0 + $0xe0] sm:$0xff]
  %v57 = vld [vmem:[%s0 + $0xe8] sm:$0xff]
  %v58 = vld [vmem:[%s0 + $0xf0] sm:$0xff]
  %v59 = vld [vmem:[%s0 + $0xf8] sm:$0xff]
  %v60 = vlaneseq
  %v61 = vshrl.u32 %v60, 7
  %v62 = vsub.s32 0, %v61
  %v63 = vrot.slane %v17, %v62
  %vm64 = vcmask 130048
  %v66 = vsel %vm64, %v28, 0
  %v69 = vsel %vm64, %v29, 0
  %v72 = vsel %vm64, %v30, 0
  %v75 = vsel %vm64, %v31, 0
  %v78 = vsel %vm64, %v32, 0
  %v81 = vsel %vm64, %v33, 0
  %v84 = vsel %vm64, %v34, 0
  %v87 = vsel %vm64, %v35, 0
  %v90 = vsel %vm64, %v36, 0
  %v93 = vsel %vm64, %v37, 0
  %v96 = vsel %vm64, %v38, 0
  %v99 = vsel %vm64, %v39, 0
  %v102 = vsel %vm64, %v40, 0
  %v105 = vsel %vm64, %v41, 0
  %v108 = vsel %vm64, %v42, 0
  %v111 = vsel %vm64, %v43, 0
  %v114 = vsel %vm64, %v44, 0
  %v117 = vsel %vm64, %v45, 0
  %v120 = vsel %vm64, %v46, 0
  %v123 = vsel %vm64, %v47, 0
  %v126 = vsel %vm64, %v48, 0
  %v129 = vsel %vm64, %v49, 0
  %v132 = vsel %vm64, %v50, 0
  %v135 = vsel %vm64, %v51, 0
  %v138 = vsel %vm64, %v52, 0
  %v141 = vsel %vm64, %v53, 0
  %v144 = vsel %vm64, %v54, 0
  %v147 = vsel %vm64, %v55, 0
  %v150 = vsel %vm64, %v56, 0
  %v153 = vsel %vm64, %v57, 0
  %v156 = vsel %vm64, %v58, 0
  %v159 = vsel %vm64, %v59, 0
  %161 = vmatprep.subr.mxu0 0.0
  %162 = vmatpush1.msra.mxu0 %v18
  %163 = vmatprep.subr.mxu0 0.0
  %164 = vmatpush1.msra.mxu0 %v19
  %165 = vmatprep.subr.mxu0 0.0
  %166 = vmatpush1.msra.mxu0 0.0
  %167 = vmatprep.subr.mxu0 0.0
  %168 = vmatpush1.msra.mxu0 0.0
  %169 = vmatprep.subr.mxu0 0.0
  %170 = vmatpush1.msra.mxu0 0.0
  %171 = vmatprep.subr.mxu0 0.0
  %172 = vmatpush1.msra.mxu0 0.0
  %173 = vmatprep.subr.mxu0 0.0
  %174 = vmatpush1.msra.mxu0 0.0
  %175 = vmatprep.subr.mxu0 0.0
  %176 = vmatpush1.msra.mxu0 0.0
  %177 = vmatprep.subr.mxu0 0.0
  %178 = vmatpush1.msra.mxu0 0.0
  %179 = vmatprep.subr.mxu0 0.0
  %180 = vmatpush1.msra.mxu0 0.0
  %181 = vmatprep.subr.mxu0 0.0
  %182 = vmatpush1.msra.mxu0 0.0
  %183 = vmatprep.subr.mxu0 0.0
  %184 = vmatpush1.msra.mxu0 0.0
  %185 = vmatprep.subr.mxu0 0.0
  %186 = vmatpush1.msra.mxu0 0.0
  %187 = vmatprep.subr.mxu0 0.0
  %188 = vmatpush1.msra.mxu0 0.0
  %189 = vmatprep.subr.mxu0 0.0
  %190 = vmatpush1.msra.mxu0 0.0
  %191 = vmatprep.subr.mxu0 0.0
  %192 = vmatpush1.msra.mxu0 0.0
  %193 = vmatprep.subr.mxu0 0.0
  %194 = vmatpush1.msra.mxu0 0.0
  %195 = vmatprep.subr.mxu0 0.0
  %196 = vmatpush1.msra.mxu0 0.0
  %197 = vmatprep.subr.mxu0 0.0
  %198 = vmatpush1.msra.mxu0 0.0
  %199 = vmatprep.subr.mxu0 0.0
  %200 = vmatpush1.msra.mxu0 0.0
  %201 = vmatprep.subr.mxu0 0.0
  %202 = vmatpush1.msra.mxu0 0.0
  %203 = vmatprep.subr.mxu0 0.0
  %204 = vmatpush1.msra.mxu0 0.0
  %205 = vmatprep.subr.mxu0 0.0
  %206 = vmatpush1.msra.mxu0 0.0
  %207 = vmatprep.subr.mxu0 0.0
  %208 = vmatpush1.msra.mxu0 0.0
  %209 = vmatprep.subr.mxu0 0.0
  %210 = vmatpush1.msra.mxu0 0.0
  %211 = vmatprep.subr.mxu0 0.0
  %212 = vmatpush1.msra.mxu0 0.0
  %213 = vmatprep.subr.mxu0 0.0
  %214 = vmatpush1.msra.mxu0 0.0
  %215 = vmatprep.subr.mxu0 0.0
  %216 = vmatpush1.msra.mxu0 0.0
  %217 = vmatprep.subr.mxu0 0.0
  %218 = vmatpush1.msra.mxu0 0.0
  %219 = vmatprep.subr.mxu0 0.0
  %220 = vmatpush1.msra.mxu0 0.0
  %221 = vmatprep.subr.mxu0 0.0
  %222 = vmatpush1.msra.mxu0 0.0
  %223 = vmatprep.subr.mxu0 0.0
  %224 = vmatpush1.msra.mxu0 0.0
  %225 = vmatprep.mubr.f32.mxu0 0.0
  %226 = vmatmul.mubr.f32.gmra.mrb[0].mxu0 %v66
  %v227 = vpop.f32.mrb[0].mxu0
  %v228 = vadd.f32 %v63, %v227
  %v229 = vpop.f32.mrb[0].mxu0
  %230 = vmatprep.mubr.f32.mxu0 0.0
  %231 = vmatmul.mubr.f32.gmra.mrb[0].mxu0 %v69
  %v232 = vpop.f32.mrb[0].mxu0
  %v233 = vadd.f32 %v63, %v232
  %v234 = vpop.f32.mrb[0].mxu0
  %235 = vmatprep.mubr.f32.mxu0 0.0
  %236 = vmatmul.mubr.f32.gmra.mrb[0].mxu0 %v72
  %v237 = vpop.f32.mrb[0].mxu0
  %v238 = vadd.f32 %v63, %v237
  %v239 = vpop.f32.mrb[0].mxu0
  %240 = vmatprep.mubr.f32.mxu0 0.0
  %241 = vmatmul.mubr.f32.gmra.mrb[0].mxu0 %v75
  %v242 = vpop.f32.mrb[0].mxu0
  %v243 = vadd.f32 %v63, %v242
  %v244 = vpop.f32.mrb[0].mxu0
  %245 = vmatprep.mubr.f32.mxu0 0.0
  %246 = vmatmul.mubr.f32.gmra.mrb[0].mxu0 %v78
  %v247 = vpop.f32.mrb[0].mxu0
  %v248 = vadd.f32 %v63, %v247
  %v249 = vpop.f32.mrb[0].mxu0
  %250 = vmatprep.mubr.f32.mxu0 0.0
  %251 = vmatmul.mubr.f32.gmra.mrb[0].mxu0 %v81
  %v252 = vpop.f32.mrb[0].mxu0
  %v253 = vadd.f32 %v63, %v252
  %v254 = vpop.f32.mrb[0].mxu0
  %255 = vmatprep.mubr.f32.mxu0 0.0
  %256 = vmatmul.mubr.f32.gmra.mrb[0].mxu0 %v84
  %v257 = vpop.f32.mrb[0].mxu0
  %v258 = vadd.f32 %v63, %v257
  %v259 = vpop.f32.mrb[0].mxu0
  %260 = vmatprep.mubr.f32.mxu0 0.0
  %261 = vmatmul.mubr.f32.gmra.mrb[0].mxu0 %v87
  %v262 = vpop.f32.mrb[0].mxu0
  %v263 = vadd.f32 %v63, %v262
  %v264 = vpop.f32.mrb[0].mxu0
  %265 = vmatprep.mubr.f32.mxu0 0.0
  %266 = vmatmul.mubr.f32.gmra.mrb[0].mxu0 %v90
  %v267 = vpop.f32.mrb[0].mxu0
  %v268 = vadd.f32 %v63, %v267
  %v269 = vpop.f32.mrb[0].mxu0
  %270 = vmatprep.mubr.f32.mxu0 0.0
  %271 = vmatmul.mubr.f32.gmra.mrb[0].mxu0 %v93
  %v272 = vpop.f32.mrb[0].mxu0
  %v273 = vadd.f32 %v63, %v272
  %v274 = vpop.f32.mrb[0].mxu0
  %275 = vmatprep.mubr.f32.mxu0 0.0
  %276 = vmatmul.mubr.f32.gmra.mrb[0].mxu0 %v96
  %v277 = vpop.f32.mrb[0].mxu0
  %v278 = vadd.f32 %v63, %v277
  %v279 = vpop.f32.mrb[0].mxu0
  %280 = vmatprep.mubr.f32.mxu0 0.0
  %281 = vmatmul.mubr.f32.gmra.mrb[0].mxu0 %v99
  %v282 = vpop.f32.mrb[0].mxu0
  %v283 = vadd.f32 %v63, %v282
  %v284 = vpop.f32.mrb[0].mxu0
  %285 = vmatprep.mubr.f32.mxu0 0.0
  %286 = vmatmul.mubr.f32.gmra.mrb[0].mxu0 %v102
  %v287 = vpop.f32.mrb[0].mxu0
  %v288 = vadd.f32 %v63, %v287
  %v289 = vpop.f32.mrb[0].mxu0
  %290 = vmatprep.mubr.f32.mxu0 0.0
  %291 = vmatmul.mubr.f32.gmra.mrb[0].mxu0 %v105
  %v292 = vpop.f32.mrb[0].mxu0
  %v293 = vadd.f32 %v63, %v292
  %v294 = vpop.f32.mrb[0].mxu0
  %295 = vmatprep.mubr.f32.mxu0 0.0
  %296 = vmatmul.mubr.f32.gmra.mrb[0].mxu0 %v108
  %v297 = vpop.f32.mrb[0].mxu0
  %v298 = vadd.f32 %v63, %v297
  %v299 = vpop.f32.mrb[0].mxu0
  %300 = vmatprep.mubr.f32.mxu0 0.0
  %301 = vmatmul.mubr.f32.gmra.mrb[0].mxu0 %v111
  %v302 = vpop.f32.mrb[0].mxu0
  %v303 = vadd.f32 %v63, %v302
  %v304 = vpop.f32.mrb[0].mxu0
  %305 = vmatprep.mubr.f32.mxu0 0.0
  %306 = vmatmul.mubr.f32.gmra.mrb[0].mxu0 %v114
  %v307 = vpop.f32.mrb[0].mxu0
  %v308 = vadd.f32 %v63, %v307
  %v309 = vpop.f32.mrb[0].mxu0
  %310 = vmatprep.mubr.f32.mxu0 0.0
  %311 = vmatmul.mubr.f32.gmra.mrb[0].mxu0 %v117
  %v312 = vpop.f32.mrb[0].mxu0
  %v313 = vadd.f32 %v63, %v312
  %v314 = vpop.f32.mrb[0].mxu0
  %315 = vmatprep.mubr.f32.mxu0 0.0
  %316 = vmatmul.mubr.f32.gmra.mrb[0].mxu0 %v120
  %v317 = vpop.f32.mrb[0].mxu0
  %v318 = vadd.f32 %v63, %v317
  %v319 = vpop.f32.mrb[0].mxu0
  %320 = vmatprep.mubr.f32.mxu0 0.0
  %321 = vmatmul.mubr.f32.gmra.mrb[0].mxu0 %v123
  %v322 = vpop.f32.mrb[0].mxu0
  %v323 = vadd.f32 %v63, %v322
  %v324 = vpop.f32.mrb[0].mxu0
  %325 = vmatprep.mubr.f32.mxu0 0.0
  %326 = vmatmul.mubr.f32.gmra.mrb[0].mxu0 %v126
  %v327 = vpop.f32.mrb[0].mxu0
  %v328 = vadd.f32 %v63, %v327
  %v329 = vpop.f32.mrb[0].mxu0
  %330 = vmatprep.mubr.f32.mxu0 0.0
  %331 = vmatmul.mubr.f32.gmra.mrb[0].mxu0 %v129
  %v332 = vpop.f32.mrb[0].mxu0
  %v333 = vadd.f32 %v63, %v332
  %v334 = vpop.f32.mrb[0].mxu0
  %335 = vmatprep.mubr.f32.mxu0 0.0
  %336 = vmatmul.mubr.f32.gmra.mrb[0].mxu0 %v132
  %v337 = vpop.f32.mrb[0].mxu0
  %v338 = vadd.f32 %v63, %v337
  %v339 = vpop.f32.mrb[0].mxu0
  %340 = vmatprep.mubr.f32.mxu0 0.0
  %341 = vmatmul.mubr.f32.gmra.mrb[0].mxu0 %v135
  %v342 = vpop.f32.mrb[0].mxu0
  %v343 = vadd.f32 %v63, %v342
  %v344 = vpop.f32.mrb[0].mxu0
  %345 = vmatprep.mubr.f32.mxu0 0.0
  %346 = vmatmul.mubr.f32.gmra.mrb[0].mxu0 %v138
  %v347 = vpop.f32.mrb[0].mxu0
  %v348 = vadd.f32 %v63, %v347
  %v349 = vpop.f32.mrb[0].mxu0
  %350 = vmatprep.mubr.f32.mxu0 0.0
  %351 = vmatmul.mubr.f32.gmra.mrb[0].mxu0 %v141
  %v352 = vpop.f32.mrb[0].mxu0
  %v353 = vadd.f32 %v63, %v352
  %v354 = vpop.f32.mrb[0].mxu0
  %355 = vmatprep.mubr.f32.mxu0 0.0
  %356 = vmatmul.mubr.f32.gmra.mrb[0].mxu0 %v144
  %v357 = vpop.f32.mrb[0].mxu0
  %v358 = vadd.f32 %v63, %v357
  %v359 = vpop.f32.mrb[0].mxu0
  %360 = vmatprep.mubr.f32.mxu0 0.0
  %361 = vmatmul.mubr.f32.gmra.mrb[0].mxu0 %v147
  %v362 = vpop.f32.mrb[0].mxu0
  %v363 = vadd.f32 %v63, %v362
  %v364 = vpop.f32.mrb[0].mxu0
  %365 = vmatprep.mubr.f32.mxu0 0.0
  %366 = vmatmul.mubr.f32.gmra.mrb[0].mxu0 %v150
  %v367 = vpop.f32.mrb[0].mxu0
  %v368 = vadd.f32 %v63, %v367
  %v369 = vpop.f32.mrb[0].mxu0
  %370 = vmatprep.mubr.f32.mxu0 0.0
  %371 = vmatmul.mubr.f32.gmra.mrb[0].mxu0 %v153
  %v372 = vpop.f32.mrb[0].mxu0
  %v373 = vadd.f32 %v63, %v372
  %v374 = vpop.f32.mrb[0].mxu0
  %375 = vmatprep.mubr.f32.mxu0 0.0
  %376 = vmatmul.mubr.f32.gmra.mrb[0].mxu0 %v156
  %v377 = vpop.f32.mrb[0].mxu0
  %v378 = vadd.f32 %v63, %v377
  %v379 = vpop.f32.mrb[0].mxu0
  %380 = vmatprep.mubr.f32.mxu0 0.0
  %381 = vmatmul.mubr.f32.gmra.mrb[0].mxu0 %v159
  %v382 = vpop.f32.mrb[0].mxu0
  %v383 = vadd.f32 %v63, %v382
  %v384 = vpop.f32.mrb[0].mxu0
  %385 = vdwg.mxu0
  %vm386 = vcmask 261120
  %v387 = vsel %vm386, %v228, 0.0
  %388 = vadd.xlane.f32.xlu0 %v387
  %v389 = vpop.xlane.xlu0 %388
  %v390 = vsel %vm386, %v233, 0.0
  %391 = vadd.xlane.f32.xlu0 %v390
  %v392 = vpop.xlane.xlu0 %391
  %v393 = vsel %vm386, %v238, 0.0
  %394 = vadd.xlane.f32.xlu0 %v393
  %v395 = vpop.xlane.xlu0 %394
  %v396 = vsel %vm386, %v243, 0.0
  %397 = vadd.xlane.f32.xlu0 %v396
  %v398 = vpop.xlane.xlu0 %397
  %v399 = vsel %vm386, %v248, 0.0
  %400 = vadd.xlane.f32.xlu0 %v399
  %v401 = vpop.xlane.xlu0 %400
  %v402 = vsel %vm386, %v253, 0.0
  %403 = vadd.xlane.f32.xlu0 %v402
  %v404 = vpop.xlane.xlu0 %403
  %v405 = vsel %vm386, %v258, 0.0
  %406 = vadd.xlane.f32.xlu0 %v405
  %v407 = vpop.xlane.xlu0 %406
  %v408 = vsel %vm386, %v263, 0.0
  %409 = vadd.xlane.f32.xlu0 %v408
  %v410 = vpop.xlane.xlu0 %409
  %v411 = vsel %vm386, %v268, 0.0
  %412 = vadd.xlane.f32.xlu0 %v411
  %v413 = vpop.xlane.xlu0 %412
  %v414 = vsel %vm386, %v273, 0.0
  %415 = vadd.xlane.f32.xlu0 %v414
  %v416 = vpop.xlane.xlu0 %415
  %v417 = vsel %vm386, %v278, 0.0
  %418 = vadd.xlane.f32.xlu0 %v417
  %v419 = vpop.xlane.xlu0 %418
  %v420 = vsel %vm386, %v283, 0.0
  %421 = vadd.xlane.f32.xlu0 %v420
  %v422 = vpop.xlane.xlu0 %421
  %v423 = vsel %vm386, %v288, 0.0
  %424 = vadd.xlane.f32.xlu0 %v423
  %v425 = vpop.xlane.xlu0 %424
  %v426 = vsel %vm386, %v293, 0.0
  %427 = vadd.xlane.f32.xlu0 %v426
  %v428 = vpop.xlane.xlu0 %427
  %v429 = vsel %vm386, %v298, 0.0
  %430 = vadd.xlane.f32.xlu0 %v429
  %v431 = vpop.xlane.xlu0 %430
  %v432 = vsel %vm386, %v303, 0.0
  %433 = vadd.xlane.f32.xlu0 %v432
  %v434 = vpop.xlane.xlu0 %433
  %v435 = vsel %vm386, %v308, 0.0
  %436 = vadd.xlane.f32.xlu0 %v435
  %v437 = vpop.xlane.xlu0 %436
  %v438 = vsel %vm386, %v313, 0.0
  %439 = vadd.xlane.f32.xlu0 %v438
  %v440 = vpop.xlane.xlu0 %439
  %v441 = vsel %vm386, %v318, 0.0
  %442 = vadd.xlane.f32.xlu0 %v441
  %v443 = vpop.xlane.xlu0 %442
  %v444 = vsel %vm386, %v323, 0.0
  %445 = vadd.xlane.f32.xlu0 %v444
  %v446 = vpop.xlane.xlu0 %445
  %v447 = vsel %vm386, %v328, 0.0
  %448 = vadd.xlane.f32.xlu0 %v447
  %v449 = vpop.xlane.xlu0 %448
  %v450 = vsel %vm386, %v333, 0.0
  %451 = vadd.xlane.f32.xlu0 %v450
  %v452 = vpop.xlane.xlu0 %451
  %v453 = vsel %vm386, %v338, 0.0
  %454 = vadd.xlane.f32.xlu0 %v453
  %v455 = vpop.xlane.xlu0 %454
  %v456 = vsel %vm386, %v343, 0.0
  %457 = vadd.xlane.f32.xlu0 %v456
  %v458 = vpop.xlane.xlu0 %457
  %v459 = vsel %vm386, %v348, 0.0
  %460 = vadd.xlane.f32.xlu0 %v459
  %v461 = vpop.xlane.xlu0 %460
  %v462 = vsel %vm386, %v353, 0.0
  %463 = vadd.xlane.f32.xlu0 %v462
  %v464 = vpop.xlane.xlu0 %463
  %v465 = vsel %vm386, %v358, 0.0
  %466 = vadd.xlane.f32.xlu0 %v465
  %v467 = vpop.xlane.xlu0 %466
  %v468 = vsel %vm386, %v363, 0.0
  %469 = vadd.xlane.f32.xlu0 %v468
  %v470 = vpop.xlane.xlu0 %469
  %v471 = vsel %vm386, %v368, 0.0
  %472 = vadd.xlane.f32.xlu0 %v471
  %v473 = vpop.xlane.xlu0 %472
  %v474 = vsel %vm386, %v373, 0.0
  %475 = vadd.xlane.f32.xlu0 %v474
  %v476 = vpop.xlane.xlu0 %475
  %v477 = vsel %vm386, %v378, 0.0
  %478 = vadd.xlane.f32.xlu0 %v477
  %v479 = vpop.xlane.xlu0 %478
  %v480 = vsel %vm386, %v383, 0.0
  %481 = vadd.xlane.f32.xlu0 %v480
  %v482 = vpop.xlane.xlu0 %481
  %v483 = vrcp.pop 32.0
  %v484 = vmul.f32 %v389, %v483
  %v485 = vmul.f32 %v392, %v483
  %v486 = vmul.f32 %v395, %v483
  %v487 = vmul.f32 %v398, %v483
  %v488 = vmul.f32 %v401, %v483
  %v489 = vmul.f32 %v404, %v483
  %v490 = vmul.f32 %v407, %v483
  %v491 = vmul.f32 %v410, %v483
  %v492 = vmul.f32 %v413, %v483
  %v493 = vmul.f32 %v416, %v483
  %v494 = vmul.f32 %v419, %v483
  %v495 = vmul.f32 %v422, %v483
  %v496 = vmul.f32 %v425, %v483
  %v497 = vmul.f32 %v428, %v483
  %v498 = vmul.f32 %v431, %v483
  %v499 = vmul.f32 %v434, %v483
  %v500 = vmul.f32 %v437, %v483
  %v501 = vmul.f32 %v440, %v483
  %v502 = vmul.f32 %v443, %v483
  %v503 = vmul.f32 %v446, %v483
  %v504 = vmul.f32 %v449, %v483
  %v505 = vmul.f32 %v452, %v483
  %v506 = vmul.f32 %v455, %v483
  %v507 = vmul.f32 %v458, %v483
  %v508 = vmul.f32 %v461, %v483
  %v509 = vmul.f32 %v464, %v483
  %v510 = vmul.f32 %v467, %v483
  %v511 = vmul.f32 %v470, %v483
  %v512 = vmul.f32 %v473, %v483
  %v513 = vmul.f32 %v476, %v483
  %v514 = vmul.f32 %v479, %v483
  %v515 = vmul.f32 %v482, %v483
  %v516 = vsub.f32 %v228, %v484
  %v517 = vsub.f32 %v233, %v485
  %v518 = vsub.f32 %v238, %v486
  %v519 = vsub.f32 %v243, %v487
  %v520 = vsub.f32 %v248, %v488
  %v521 = vsub.f32 %v253, %v489
  %v522 = vsub.f32 %v258, %v490
  %v523 = vsub.f32 %v263, %v491
  %v524 = vsub.f32 %v268, %v492
  %v525 = vsub.f32 %v273, %v493
  %v526 = vsub.f32 %v278, %v494
  %v527 = vsub.f32 %v283, %v495
  %v528 = vsub.f32 %v288, %v496
  %v529 = vsub.f32 %v293, %v497
  %v530 = vsub.f32 %v298, %v498
  %v531 = vsub.f32 %v303, %v499
  %v532 = vsub.f32 %v308, %v500
  %v533 = vsub.f32 %v313, %v501
  %v534 = vsub.f32 %v318, %v502
  %v535 = vsub.f32 %v323, %v503
  %v536 = vsub.f32 %v328, %v504
  %v537 = vsub.f32 %v333, %v505
  %v538 = vsub.f32 %v338, %v506
  %v539 = vsub.f32 %v343, %v507
  %v540 = vsub.f32 %v348, %v508
  %v541 = vsub.f32 %v353, %v509
  %v542 = vsub.f32 %v358, %v510
  %v543 = vsub.f32 %v363, %v511
  %v544 = vsub.f32 %v368, %v512
  %v545 = vsub.f32 %v373, %v513
  %v546 = vsub.f32 %v378, %v514
  %v547 = vsub.f32 %v383, %v515
  %v548 = vmul.f32 %v516, %v516
  %v549 = vmul.f32 %v517, %v517
  %v550 = vmul.f32 %v518, %v518
  %v551 = vmul.f32 %v519, %v519
  %v552 = vmul.f32 %v520, %v520
  %v553 = vmul.f32 %v521, %v521
  %v554 = vmul.f32 %v522, %v522
  %v555 = vmul.f32 %v523, %v523
  %v556 = vmul.f32 %v524, %v524
  %v557 = vmul.f32 %v525, %v525
  %v558 = vmul.f32 %v526, %v526
  %v559 = vmul.f32 %v527, %v527
  %v560 = vmul.f32 %v528, %v528
  %v561 = vmul.f32 %v529, %v529
  %v562 = vmul.f32 %v530, %v530
  %v563 = vmul.f32 %v531, %v531
  %v564 = vmul.f32 %v532, %v532
  %v565 = vmul.f32 %v533, %v533
  %v566 = vmul.f32 %v534, %v534
  %v567 = vmul.f32 %v535, %v535
  %v568 = vmul.f32 %v536, %v536
  %v569 = vmul.f32 %v537, %v537
  %v570 = vmul.f32 %v538, %v538
  %v571 = vmul.f32 %v539, %v539
  %v572 = vmul.f32 %v540, %v540
  %v573 = vmul.f32 %v541, %v541
  %v574 = vmul.f32 %v542, %v542
  %v575 = vmul.f32 %v543, %v543
  %v576 = vmul.f32 %v544, %v544
  %v577 = vmul.f32 %v545, %v545
  %v578 = vmul.f32 %v546, %v546
  %v579 = vmul.f32 %v547, %v547
  %v580 = vsel %vm386, %v548, 0.0
  %581 = vadd.xlane.f32.xlu0 %v580
  %v582 = vpop.xlane.xlu0 %581
  %v583 = vsel %vm386, %v549, 0.0
  %584 = vadd.xlane.f32.xlu0 %v583
  %v585 = vpop.xlane.xlu0 %584
  %v586 = vsel %vm386, %v550, 0.0
  %587 = vadd.xlane.f32.xlu0 %v586
  %v588 = vpop.xlane.xlu0 %587
  %v589 = vsel %vm386, %v551, 0.0
  %590 = vadd.xlane.f32.xlu0 %v589
  %v591 = vpop.xlane.xlu0 %590
  %v592 = vsel %vm386, %v552, 0.0
  %593 = vadd.xlane.f32.xlu0 %v592
  %v594 = vpop.xlane.xlu0 %593
  %v595 = vsel %vm386, %v553, 0.0
  %596 = vadd.xlane.f32.xlu0 %v595
  %v597 = vpop.xlane.xlu0 %596
  %v598 = vsel %vm386, %v554, 0.0
  %599 = vadd.xlane.f32.xlu0 %v598
  %v600 = vpop.xlane.xlu0 %599
  %v601 = vsel %vm386, %v555, 0.0
  %602 = vadd.xlane.f32.xlu0 %v601
  %v603 = vpop.xlane.xlu0 %602
  %v604 = vsel %vm386, %v556, 0.0
  %605 = vadd.xlane.f32.xlu0 %v604
  %v606 = vpop.xlane.xlu0 %605
  %v607 = vsel %vm386, %v557, 0.0
  %608 = vadd.xlane.f32.xlu0 %v607
  %v609 = vpop.xlane.xlu0 %608
  %v610 = vsel %vm386, %v558, 0.0
  %611 = vadd.xlane.f32.xlu0 %v610
  %v612 = vpop.xlane.xlu0 %611
  %v613 = vsel %vm386, %v559, 0.0
  %614 = vadd.xlane.f32.xlu0 %v613
  %v615 = vpop.xlane.xlu0 %614
  %v616 = vsel %vm386, %v560, 0.0
  %617 = vadd.xlane.f32.xlu0 %v616
  %v618 = vpop.xlane.xlu0 %617
  %v619 = vsel %vm386, %v561, 0.0
  %620 = vadd.xlane.f32.xlu0 %v619
  %v621 = vpop.xlane.xlu0 %620
  %v622 = vsel %vm386, %v562, 0.0
  %623 = vadd.xlane.f32.xlu0 %v622
  %v624 = vpop.xlane.xlu0 %623
  %v625 = vsel %vm386, %v563, 0.0
  %626 = vadd.xlane.f32.xlu0 %v625
  %v627 = vpop.xlane.xlu0 %626
  %v628 = vsel %vm386, %v564, 0.0
  %629 = vadd.xlane.f32.xlu0 %v628
  %v630 = vpop.xlane.xlu0 %629
  %v631 = vsel %vm386, %v565, 0.0
  %632 = vadd.xlane.f32.xlu0 %v631
  %v633 = vpop.xlane.xlu0 %632
  %v634 = vsel %vm386, %v566, 0.0
  %635 = vadd.xlane.f32.xlu0 %v634
  %v636 = vpop.xlane.xlu0 %635
  %v637 = vsel %vm386, %v567, 0.0
  %638 = vadd.xlane.f32.xlu0 %v637
  %v639 = vpop.xlane.xlu0 %638
  %v640 = vsel %vm386, %v568, 0.0
  %641 = vadd.xlane.f32.xlu0 %v640
  %v642 = vpop.xlane.xlu0 %641
  %v643 = vsel %vm386, %v569, 0.0
  %644 = vadd.xlane.f32.xlu0 %v643
  %v645 = vpop.xlane.xlu0 %644
  %v646 = vsel %vm386, %v570, 0.0
  %647 = vadd.xlane.f32.xlu0 %v646
  %v648 = vpop.xlane.xlu0 %647
  %v649 = vsel %vm386, %v571, 0.0
  %650 = vadd.xlane.f32.xlu0 %v649
  %v651 = vpop.xlane.xlu0 %650
  %v652 = vsel %vm386, %v572, 0.0
  %653 = vadd.xlane.f32.xlu0 %v652
  %v654 = vpop.xlane.xlu0 %653
  %v655 = vsel %vm386, %v573, 0.0
  %656 = vadd.xlane.f32.xlu0 %v655
  %v657 = vpop.xlane.xlu0 %656
  %v658 = vsel %vm386, %v574, 0.0
  %659 = vadd.xlane.f32.xlu0 %v658
  %v660 = vpop.xlane.xlu0 %659
  %v661 = vsel %vm386, %v575, 0.0
  %662 = vadd.xlane.f32.xlu0 %v661
  %v663 = vpop.xlane.xlu0 %662
  %v664 = vsel %vm386, %v576, 0.0
  %665 = vadd.xlane.f32.xlu0 %v664
  %v666 = vpop.xlane.xlu0 %665
  %v667 = vsel %vm386, %v577, 0.0
  %668 = vadd.xlane.f32.xlu0 %v667
  %v669 = vpop.xlane.xlu0 %668
  %v670 = vsel %vm386, %v578, 0.0
  %671 = vadd.xlane.f32.xlu0 %v670
  %v672 = vpop.xlane.xlu0 %671
  %v673 = vsel %vm386, %v579, 0.0
  %674 = vadd.xlane.f32.xlu0 %v673
  %v675 = vpop.xlane.xlu0 %674
  %v676 = vmul.f32 %v582, %v483
  %v677 = vmul.f32 %v585, %v483
  %v678 = vmul.f32 %v588, %v483
  %v679 = vmul.f32 %v591, %v483
  %v680 = vmul.f32 %v594, %v483
  %v681 = vmul.f32 %v597, %v483
  %v682 = vmul.f32 %v600, %v483
  %v683 = vmul.f32 %v603, %v483
  %v684 = vmul.f32 %v606, %v483
  %v685 = vmul.f32 %v609, %v483
  %v686 = vmul.f32 %v612, %v483
  %v687 = vmul.f32 %v615, %v483
  %v688 = vmul.f32 %v618, %v483
  %v689 = vmul.f32 %v621, %v483
  %v690 = vmul.f32 %v624, %v483
  %v691 = vmul.f32 %v627, %v483
  %v692 = vmul.f32 %v630, %v483
  %v693 = vmul.f32 %v633, %v483
  %v694 = vmul.f32 %v636, %v483
  %v695 = vmul.f32 %v639, %v483
  %v696 = vmul.f32 %v642, %v483
  %v697 = vmul.f32 %v645, %v483
  %v698 = vmul.f32 %v648, %v483
  %v699 = vmul.f32 %v651, %v483
  %v700 = vmul.f32 %v654, %v483
  %v701 = vmul.f32 %v657, %v483
  %v702 = vmul.f32 %v660, %v483
  %v703 = vmul.f32 %v663, %v483
  %v704 = vmul.f32 %v666, %v483
  %v705 = vmul.f32 %v669, %v483
  %v706 = vmul.f32 %v672, %v483
  %v707 = vmul.f32 %v675, %v483
  %v708 = vadd.f32 %v676, 1e-05
  %v709 = vadd.f32 %v677, 1e-05
  %v710 = vadd.f32 %v678, 1e-05
  %v711 = vadd.f32 %v679, 1e-05
  %v712 = vadd.f32 %v680, 1e-05
  %v713 = vadd.f32 %v681, 1e-05
  %v714 = vadd.f32 %v682, 1e-05
  %v715 = vadd.f32 %v683, 1e-05
  %v716 = vadd.f32 %v684, 1e-05
  %v717 = vadd.f32 %v685, 1e-05
  %v718 = vadd.f32 %v686, 1e-05
  %v719 = vadd.f32 %v687, 1e-05
  %v720 = vadd.f32 %v688, 1e-05
  %v721 = vadd.f32 %v689, 1e-05
  %v722 = vadd.f32 %v690, 1e-05
  %v723 = vadd.f32 %v691, 1e-05
  %v724 = vadd.f32 %v692, 1e-05
  %v725 = vadd.f32 %v693, 1e-05
  %v726 = vadd.f32 %v694, 1e-05
  %v727 = vadd.f32 %v695, 1e-05
  %v728 = vadd.f32 %v696, 1e-05
  %v729 = vadd.f32 %v697, 1e-05
  %v730 = vadd.f32 %v698, 1e-05
  %v731 = vadd.f32 %v699, 1e-05
  %v732 = vadd.f32 %v700, 1e-05
  %v733 = vadd.f32 %v701, 1e-05
  %v734 = vadd.f32 %v702, 1e-05
  %v735 = vadd.f32 %v703, 1e-05
  %v736 = vadd.f32 %v704, 1e-05
  %v737 = vadd.f32 %v705, 1e-05
  %v738 = vadd.f32 %v706, 1e-05
  %v739 = vadd.f32 %v707, 1e-05
  %v740 = vrsqrt.pop %v708
  %v741 = vrsqrt.pop %v709
  %v742 = vrsqrt.pop %v710
  %v743 = vrsqrt.pop %v711
  %v744 = vrsqrt.pop %v712
  %v745 = vrsqrt.pop %v713
  %v746 = vrsqrt.pop %v714
  %v747 = vrsqrt.pop %v715
  %v748 = vrsqrt.pop %v716
  %v749 = vrsqrt.pop %v717
  %v750 = vrsqrt.pop %v718
  %v751 = vrsqrt.pop %v719
  %v752 = vrsqrt.pop %v720
  %v753 = vrsqrt.pop %v721
  %v754 = vrsqrt.pop %v722
  %v755 = vrsqrt.pop %v723
  %v756 = vrsqrt.pop %v724
  %v757 = vrsqrt.pop %v725
  %v758 = vrsqrt.pop %v726
  %v759 = vrsqrt.pop %v727
  %v760 = vrsqrt.pop %v728
  %v761 = vrsqrt.pop %v729
  %v762 = vrsqrt.pop %v730
  %v763 = vrsqrt.pop %v731
  %v764 = vrsqrt.pop %v732
  %v765 = vrsqrt.pop %v733
  %v766 = vrsqrt.pop %v734
  %v767 = vrsqrt.pop %v735
  %v768 = vrsqrt.pop %v736
  %v769 = vrsqrt.pop %v737
  %v770 = vrsqrt.pop %v738
  %v771 = vrsqrt.pop %v739
  %v772 = vmul.f32 %v516, %v740
  %v773 = vmul.f32 %v517, %v741
  %v774 = vmul.f32 %v518, %v742
  %v775 = vmul.f32 %v519, %v743
  %v776 = vmul.f32 %v520, %v744
  %v777 = vmul.f32 %v521, %v745
  %v778 = vmul.f32 %v522, %v746
  %v779 = vmul.f32 %v523, %v747
  %v780 = vmul.f32 %v524, %v748
  %v781 = vmul.f32 %v525, %v749
  %v782 = vmul.f32 %v526, %v750
  %v783 = vmul.f32 %v527, %v751
  %v784 = vmul.f32 %v528, %v752
  %v785 = vmul.f32 %v529, %v753
  %v786 = vmul.f32 %v530, %v754
  %v787 = vmul.f32 %v531, %v755
  %v788 = vmul.f32 %v532, %v756
  %v789 = vmul.f32 %v533, %v757
  %v790 = vmul.f32 %v534, %v758
  %v791 = vmul.f32 %v535, %v759
  %v792 = vmul.f32 %v536, %v760
  %v793 = vmul.f32 %v537, %v761
  %v794 = vmul.f32 %v538, %v762
  %v795 = vmul.f32 %v539, %v763
  %v796 = vmul.f32 %v540, %v764
  %v797 = vmul.f32 %v541, %v765
  %v798 = vmul.f32 %v542, %v766
  %v799 = vmul.f32 %v543, %v767
  %v800 = vmul.f32 %v544, %v768
  %v801 = vmul.f32 %v545, %v769
  %v802 = vmul.f32 %v546, %v770
  %v803 = vmul.f32 %v547, %v771
  %v804 = vlaneseq
  %v805 = vshrl.u32 %v804, 7
  %v806 = vsub.s32 1, %v805
  %v807 = vrot.slane %v17, %v806
  %v808 = vmul.f32 %v772, %v807
  %v809 = vmul.f32 %v773, %v807
  %v810 = vmul.f32 %v774, %v807
  %v811 = vmul.f32 %v775, %v807
  %v812 = vmul.f32 %v776, %v807
  %v813 = vmul.f32 %v777, %v807
  %v814 = vmul.f32 %v778, %v807
  %v815 = vmul.f32 %v779, %v807
  %v816 = vmul.f32 %v780, %v807
  %v817 = vmul.f32 %v781, %v807
  %v818 = vmul.f32 %v782, %v807
  %v819 = vmul.f32 %v783, %v807
  %v820 = vmul.f32 %v784, %v807
  %v821 = vmul.f32 %v785, %v807
  %v822 = vmul.f32 %v786, %v807
  %v823 = vmul.f32 %v787, %v807
  %v824 = vmul.f32 %v788, %v807
  %v825 = vmul.f32 %v789, %v807
  %v826 = vmul.f32 %v790, %v807
  %v827 = vmul.f32 %v791, %v807
  %v828 = vmul.f32 %v792, %v807
  %v829 = vmul.f32 %v793, %v807
  %v830 = vmul.f32 %v794, %v807
  %v831 = vmul.f32 %v795, %v807
  %v832 = vmul.f32 %v796, %v807
  %v833 = vmul.f32 %v797, %v807
  %v834 = vmul.f32 %v798, %v807
  %v835 = vmul.f32 %v799, %v807
  %v836 = vmul.f32 %v800, %v807
  %v837 = vmul.f32 %v801, %v807
  %v838 = vmul.f32 %v802, %v807
  %v839 = vmul.f32 %v803, %v807
  %v840 = vlaneseq
  %v841 = vshrl.u32 %v840, 7
  %v842 = vsub.s32 2, %v841
  %v843 = vrot.slane %v17, %v842
  %v844 = vadd.f32 %v808, %v843
  %v845 = vadd.f32 %v809, %v843
  %v846 = vadd.f32 %v810, %v843
  %v847 = vadd.f32 %v811, %v843
  %v848 = vadd.f32 %v812, %v843
  %v849 = vadd.f32 %v813, %v843
  %v850 = vadd.f32 %v814, %v843
  %v851 = vadd.f32 %v815, %v843
  %v852 = vadd.f32 %v816, %v843
  %v853 = vadd.f32 %v817, %v843
  %v854 = vadd.f32 %v818, %v843
  %v855 = vadd.f32 %v819, %v843
  %v856 = vadd.f32 %v820, %v843
  %v857 = vadd.f32 %v821, %v843
  %v858 = vadd.f32 %v822, %v843
  %v859 = vadd.f32 %v823, %v843
  %v860 = vadd.f32 %v824, %v843
  %v861 = vadd.f32 %v825, %v843
  %v862 = vadd.f32 %v826, %v843
  %v863 = vadd.f32 %v827, %v843
  %v864 = vadd.f32 %v828, %v843
  %v865 = vadd.f32 %v829, %v843
  %v866 = vadd.f32 %v830, %v843
  %v867 = vadd.f32 %v831, %v843
  %v868 = vadd.f32 %v832, %v843
  %v869 = vadd.f32 %v833, %v843
  %v870 = vadd.f32 %v834, %v843
  %v871 = vadd.f32 %v835, %v843
  %v872 = vadd.f32 %v836, %v843
  %v873 = vadd.f32 %v837, %v843
  %v874 = vadd.f32 %v838, %v843
  %v875 = vadd.f32 %v839, %v843
  %v876 = vmul.f32 %v844, 0.5
  %v877 = vmul.f32 %v845, 0.5
  %v878 = vmul.f32 %v846, 0.5
  %v879 = vmul.f32 %v847, 0.5
  %v880 = vmul.f32 %v848, 0.5
  %v881 = vmul.f32 %v849, 0.5
  %v882 = vmul.f32 %v850, 0.5
  %v883 = vmul.f32 %v851, 0.5
  %v884 = vmul.f32 %v852, 0.5
  %v885 = vmul.f32 %v853, 0.5
  %v886 = vmul.f32 %v854, 0.5
  %v887 = vmul.f32 %v855, 0.5
  %v888 = vmul.f32 %v856, 0.5
  %v889 = vmul.f32 %v857, 0.5
  %v890 = vmul.f32 %v858, 0.5
  %v891 = vmul.f32 %v859, 0.5
  %v892 = vmul.f32 %v860, 0.5
  %v893 = vmul.f32 %v861, 0.5
  %v894 = vmul.f32 %v862, 0.5
  %v895 = vmul.f32 %v863, 0.5
  %v896 = vmul.f32 %v864, 0.5
  %v897 = vmul.f32 %v865, 0.5
  %v898 = vmul.f32 %v866, 0.5
  %v899 = vmul.f32 %v867, 0.5
  %v900 = vmul.f32 %v868, 0.5
  %v901 = vmul.f32 %v869, 0.5
  %v902 = vmul.f32 %v870, 0.5
  %v903 = vmul.f32 %v871, 0.5
  %v904 = vmul.f32 %v872, 0.5
  %v905 = vmul.f32 %v873, 0.5
  %v906 = vmul.f32 %v874, 0.5
  %v907 = vmul.f32 %v875, 0.5
  %v908 = vmul.f32 %v844, 0.70710677
  %v909 = vmul.f32 %v845, 0.70710677
  %v910 = vmul.f32 %v846, 0.70710677
  %v911 = vmul.f32 %v847, 0.70710677
  %v912 = vmul.f32 %v848, 0.70710677
  %v913 = vmul.f32 %v849, 0.70710677
  %v914 = vmul.f32 %v850, 0.70710677
  %v915 = vmul.f32 %v851, 0.70710677
  %v916 = vmul.f32 %v852, 0.70710677
  %v917 = vmul.f32 %v853, 0.70710677
  %v918 = vmul.f32 %v854, 0.70710677
  %v919 = vmul.f32 %v855, 0.70710677
  %v920 = vmul.f32 %v856, 0.70710677
  %v921 = vmul.f32 %v857, 0.70710677
  %v922 = vmul.f32 %v858, 0.70710677
  %v923 = vmul.f32 %v859, 0.70710677
  %v924 = vmul.f32 %v860, 0.70710677
  %v925 = vmul.f32 %v861, 0.70710677
  %v926 = vmul.f32 %v862, 0.70710677
  %v927 = vmul.f32 %v863, 0.70710677
  %v928 = vmul.f32 %v864, 0.70710677
  %v929 = vmul.f32 %v865, 0.70710677
  %v930 = vmul.f32 %v866, 0.70710677
  %v931 = vmul.f32 %v867, 0.70710677
  %v932 = vmul.f32 %v868, 0.70710677
  %v933 = vmul.f32 %v869, 0.70710677
  %v934 = vmul.f32 %v870, 0.70710677
  %v935 = vmul.f32 %v871, 0.70710677
  %v936 = vmul.f32 %v872, 0.70710677
  %v937 = vmul.f32 %v873, 0.70710677
  %v938 = vmul.f32 %v874, 0.70710677
  %v939 = vmul.f32 %v875, 0.70710677
  %v940 = verf.f32.pop %v908
  %v941 = verf.f32.pop %v909
  %v942 = verf.f32.pop %v910
  %v943 = verf.f32.pop %v911
  %v944 = verf.f32.pop %v912
  %v945 = verf.f32.pop %v913
  %v946 = verf.f32.pop %v914
  %v947 = verf.f32.pop %v915
  %v948 = verf.f32.pop %v916
  %v949 = verf.f32.pop %v917
  %v950 = verf.f32.pop %v918
  %v951 = verf.f32.pop %v919
  %v952 = verf.f32.pop %v920
  %v953 = verf.f32.pop %v921
  %v954 = verf.f32.pop %v922
  %v955 = verf.f32.pop %v923
  %v956 = verf.f32.pop %v924
  %v957 = verf.f32.pop %v925
  %v958 = verf.f32.pop %v926
  %v959 = verf.f32.pop %v927
  %v960 = verf.f32.pop %v928
  %v961 = verf.f32.pop %v929
  %v962 = verf.f32.pop %v930
  %v963 = verf.f32.pop %v931
  %v964 = verf.f32.pop %v932
  %v965 = verf.f32.pop %v933
  %v966 = verf.f32.pop %v934
  %v967 = verf.f32.pop %v935
  %v968 = verf.f32.pop %v936
  %v969 = verf.f32.pop %v937
  %v970 = verf.f32.pop %v938
  %v971 = verf.f32.pop %v939
  %v972 = vadd.f32 %v940, 1.0
  %v973 = vadd.f32 %v941, 1.0
  %v974 = vadd.f32 %v942, 1.0
  %v975 = vadd.f32 %v943, 1.0
  %v976 = vadd.f32 %v944, 1.0
  %v977 = vadd.f32 %v945, 1.0
  %v978 = vadd.f32 %v946, 1.0
  %v979 = vadd.f32 %v947, 1.0
  %v980 = vadd.f32 %v948, 1.0
  %v981 = vadd.f32 %v949, 1.0
  %v982 = vadd.f32 %v950, 1.0
  %v983 = vadd.f32 %v951, 1.0
  %v984 = vadd.f32 %v952, 1.0
  %v985 = vadd.f32 %v953, 1.0
  %v986 = vadd.f32 %v954, 1.0
  %v987 = vadd.f32 %v955, 1.0
  %v988 = vadd.f32 %v956, 1.0
  %v989 = vadd.f32 %v957, 1.0
  %v990 = vadd.f32 %v958, 1.0
  %v991 = vadd.f32 %v959, 1.0
  %v992 = vadd.f32 %v960, 1.0
  %v993 = vadd.f32 %v961, 1.0
  %v994 = vadd.f32 %v962, 1.0
  %v995 = vadd.f32 %v963, 1.0
  %v996 = vadd.f32 %v964, 1.0
  %v997 = vadd.f32 %v965, 1.0
  %v998 = vadd.f32 %v966, 1.0
  %v999 = vadd.f32 %v967, 1.0
  %v1000 = vadd.f32 %v968, 1.0
  %v1001 = vadd.f32 %v969, 1.0
  %v1002 = vadd.f32 %v970, 1.0
  %v1003 = vadd.f32 %v971, 1.0
  %v1004 = vmul.f32 %v876, %v972
  %v1005 = vmul.f32 %v877, %v973
  %v1006 = vmul.f32 %v878, %v974
  %v1007 = vmul.f32 %v879, %v975
  %v1008 = vmul.f32 %v880, %v976
  %v1009 = vmul.f32 %v881, %v977
  %v1010 = vmul.f32 %v882, %v978
  %v1011 = vmul.f32 %v883, %v979
  %v1012 = vmul.f32 %v884, %v980
  %v1013 = vmul.f32 %v885, %v981
  %v1014 = vmul.f32 %v886, %v982
  %v1015 = vmul.f32 %v887, %v983
  %v1016 = vmul.f32 %v888, %v984
  %v1017 = vmul.f32 %v889, %v985
  %v1018 = vmul.f32 %v890, %v986
  %v1019 = vmul.f32 %v891, %v987
  %v1020 = vmul.f32 %v892, %v988
  %v1021 = vmul.f32 %v893, %v989
  %v1022 = vmul.f32 %v894, %v990
  %v1023 = vmul.f32 %v895, %v991
  %v1024 = vmul.f32 %v896, %v992
  %v1025 = vmul.f32 %v897, %v993
  %v1026 = vmul.f32 %v898, %v994
  %v1027 = vmul.f32 %v899, %v995
  %v1028 = vmul.f32 %v900, %v996
  %v1029 = vmul.f32 %v901, %v997
  %v1030 = vmul.f32 %v902, %v998
  %v1031 = vmul.f32 %v903, %v999
  %v1032 = vmul.f32 %v904, %v1000
  %v1033 = vmul.f32 %v905, %v1001
  %v1034 = vmul.f32 %v906, %v1002
  %v1035 = vmul.f32 %v907, %v1003
  %v1036 = vlaneseq
  %v1037 = vshrl.u32 %v1036, 7
  %v1038 = vsub.s32 3, %v1037
  %v1039 = vrot.slane %v17, %v1038
  %v1041 = vsel %vm386, %v1004, 0
  %v1044 = vsel %vm386, %v1005, 0
  %v1047 = vsel %vm386, %v1006, 0
  %v1050 = vsel %vm386, %v1007, 0
  %v1053 = vsel %vm386, %v1008, 0
  %v1056 = vsel %vm386, %v1009, 0
  %v1059 = vsel %vm386, %v1010, 0
  %v1062 = vsel %vm386, %v1011, 0
  %v1065 = vsel %vm386, %v1012, 0
  %v1068 = vsel %vm386, %v1013, 0
  %v1071 = vsel %vm386, %v1014, 0
  %v1074 = vsel %vm386, %v1015, 0
  %v1077 = vsel %vm386, %v1016, 0
  %v1080 = vsel %vm386, %v1017, 0
  %v1083 = vsel %vm386, %v1018, 0
  %v1086 = vsel %vm386, %v1019, 0
  %v1089 = vsel %vm386, %v1020, 0
  %v1092 = vsel %vm386, %v1021, 0
  %v1095 = vsel %vm386, %v1022, 0
  %v1098 = vsel %vm386, %v1023, 0
  %v1101 = vsel %vm386, %v1024, 0
  %v1104 = vsel %vm386, %v1025, 0
  %v1107 = vsel %vm386, %v1026, 0
  %v1110 = vsel %vm386, %v1027, 0
  %v1113 = vsel %vm386, %v1028, 0
  %v1116 = vsel %vm386, %v1029, 0
  %v1119 = vsel %vm386, %v1030, 0
  %v1122 = vsel %vm386, %v1031, 0
  %v1125 = vsel %vm386, %v1032, 0
  %v1128 = vsel %vm386, %v1033, 0
  %v1131 = vsel %vm386, %v1034, 0
  %v1134 = vsel %vm386, %v1035, 0
  %1136 = vmatprep.subr.mxu0 0.0
  %1137 = vmatpush1.msra.mxu0 %v20
  %1138 = vmatprep.subr.mxu0 0.0
  %1139 = vmatpush1.msra.mxu0 %v21
  %1140 = vmatprep.subr.mxu0 0.0
  %1141 = vmatpush1.msra.mxu0 %v22
  %1142 = vmatprep.subr.mxu0 0.0
  %1143 = vmatpush1.msra.mxu0 %v23
  %1144 = vmatprep.subr.mxu0 0.0
  %1145 = vmatpush1.msra.mxu0 0.0
  %1146 = vmatprep.subr.mxu0 0.0
  %1147 = vmatpush1.msra.mxu0 0.0
  %1148 = vmatprep.subr.mxu0 0.0
  %1149 = vmatpush1.msra.mxu0 0.0
  %1150 = vmatprep.subr.mxu0 0.0
  %1151 = vmatpush1.msra.mxu0 0.0
  %1152 = vmatprep.subr.mxu0 0.0
  %1153 = vmatpush1.msra.mxu0 0.0
  %1154 = vmatprep.subr.mxu0 0.0
  %1155 = vmatpush1.msra.mxu0 0.0
  %1156 = vmatprep.subr.mxu0 0.0
  %1157 = vmatpush1.msra.mxu0 0.0
  %1158 = vmatprep.subr.mxu0 0.0
  %1159 = vmatpush1.msra.mxu0 0.0
  %1160 = vmatprep.subr.mxu0 0.0
  %1161 = vmatpush1.msra.mxu0 0.0
  %1162 = vmatprep.subr.mxu0 0.0
  %1163 = vmatpush1.msra.mxu0 0.0
  %1164 = vmatprep.subr.mxu0 0.0
  %1165 = vmatpush1.msra.mxu0 0.0
  %1166 = vmatprep.subr.mxu0 0.0
  %1167 = vmatpush1.msra.mxu0 0.0
  %1168 = vmatprep.subr.mxu0 0.0
  %1169 = vmatpush1.msra.mxu0 0.0
  %1170 = vmatprep.subr.mxu0 0.0
  %1171 = vmatpush1.msra.mxu0 0.0
  %1172 = vmatprep.subr.mxu0 0.0
  %1173 = vmatpush1.msra.mxu0 0.0
  %1174 = vmatprep.subr.mxu0 0.0
  %1175 = vmatpush1.msra.mxu0 0.0
  %1176 = vmatprep.subr.mxu0 0.0
  %1177 = vmatpush1.msra.mxu0 0.0
  %1178 = vmatprep.subr.mxu0 0.0
  %1179 = vmatpush1.msra.mxu0 0.0
  %1180 = vmatprep.subr.mxu0 0.0
  %1181 = vmatpush1.msra.mxu0 0.0
  %1182 = vmatprep.subr.mxu0 0.0
  %1183 = vmatpush1.msra.mxu0 0.0
  %1184 = vmatprep.subr.mxu0 0.0
  %1185 = vmatpush1.msra.mxu0 0.0
  %1186 = vmatprep.subr.mxu0 0.0
  %1187 = vmatpush1.msra.mxu0 0.0
  %1188 = vmatprep.subr.mxu0 0.0
  %1189 = vmatpush1.msra.mxu0 0.0
  %1190 = vmatprep.subr.mxu0 0.0
  %1191 = vmatpush1.msra.mxu0 0.0
  %1192 = vmatprep.subr.mxu0 0.0
  %1193 = vmatpush1.msra.mxu0 0.0
  %1194 = vmatprep.subr.mxu0 0.0
  %1195 = vmatpush1.msra.mxu0 0.0
  %1196 = vmatprep.subr.mxu0 0.0
  %1197 = vmatpush1.msra.mxu0 0.0
  %1198 = vmatprep.subr.mxu0 0.0
  %1199 = vmatpush1.msra.mxu0 0.0
  %1200 = vmatprep.mubr.f32.mxu0 0.0
  %1201 = vmatmul.mubr.f32.gmra.mrb[0].mxu0 %v1041
  %v1202 = vpop.f32.mrb[0].mxu0
  %v1203 = vadd.f32 %v1039, %v1202
  %v1204 = vpop.f32.mrb[0].mxu0
  %1205 = vmatprep.mubr.f32.mxu0 0.0
  %1206 = vmatmul.mubr.f32.gmra.mrb[0].mxu0 %v1044
  %v1207 = vpop.f32.mrb[0].mxu0
  %v1208 = vadd.f32 %v1039, %v1207
  %v1209 = vpop.f32.mrb[0].mxu0
  %1210 = vmatprep.mubr.f32.mxu0 0.0
  %1211 = vmatmul.mubr.f32.gmra.mrb[0].mxu0 %v1047
  %v1212 = vpop.f32.mrb[0].mxu0
  %v1213 = vadd.f32 %v1039, %v1212
  %v1214 = vpop.f32.mrb[0].mxu0
  %1215 = vmatprep.mubr.f32.mxu0 0.0
  %1216 = vmatmul.mubr.f32.gmra.mrb[0].mxu0 %v1050
  %v1217 = vpop.f32.mrb[0].mxu0
  %v1218 = vadd.f32 %v1039, %v1217
  %v1219 = vpop.f32.mrb[0].mxu0
  %1220 = vmatprep.mubr.f32.mxu0 0.0
  %1221 = vmatmul.mubr.f32.gmra.mrb[0].mxu0 %v1053
  %v1222 = vpop.f32.mrb[0].mxu0
  %v1223 = vadd.f32 %v1039, %v1222
  %v1224 = vpop.f32.mrb[0].mxu0
  %1225 = vmatprep.mubr.f32.mxu0 0.0
  %1226 = vmatmul.mubr.f32.gmra.mrb[0].mxu0 %v1056
  %v1227 = vpop.f32.mrb[0].mxu0
  %v1228 = vadd.f32 %v1039, %v1227
  %v1229 = vpop.f32.mrb[0].mxu0
  %1230 = vmatprep.mubr.f32.mxu0 0.0
  %1231 = vmatmul.mubr.f32.gmra.mrb[0].mxu0 %v1059
  %v1232 = vpop.f32.mrb[0].mxu0
  %v1233 = vadd.f32 %v1039, %v1232
  %v1234 = vpop.f32.mrb[0].mxu0
  %1235 = vmatprep.mubr.f32.mxu0 0.0
  %1236 = vmatmul.mubr.f32.gmra.mrb[0].mxu0 %v1062
  %v1237 = vpop.f32.mrb[0].mxu0
  %v1238 = vadd.f32 %v1039, %v1237
  %v1239 = vpop.f32.mrb[0].mxu0
  %1240 = vmatprep.mubr.f32.mxu0 0.0
  %1241 = vmatmul.mubr.f32.gmra.mrb[0].mxu0 %v1065
  %v1242 = vpop.f32.mrb[0].mxu0
  %v1243 = vadd.f32 %v1039, %v1242
  %v1244 = vpop.f32.mrb[0].mxu0
  %1245 = vmatprep.mubr.f32.mxu0 0.0
  %1246 = vmatmul.mubr.f32.gmra.mrb[0].mxu0 %v1068
  %v1247 = vpop.f32.mrb[0].mxu0
  %v1248 = vadd.f32 %v1039, %v1247
  %v1249 = vpop.f32.mrb[0].mxu0
  %1250 = vmatprep.mubr.f32.mxu0 0.0
  %1251 = vmatmul.mubr.f32.gmra.mrb[0].mxu0 %v1071
  %v1252 = vpop.f32.mrb[0].mxu0
  %v1253 = vadd.f32 %v1039, %v1252
  %v1254 = vpop.f32.mrb[0].mxu0
  %1255 = vmatprep.mubr.f32.mxu0 0.0
  %1256 = vmatmul.mubr.f32.gmra.mrb[0].mxu0 %v1074
  %v1257 = vpop.f32.mrb[0].mxu0
  %v1258 = vadd.f32 %v1039, %v1257
  %v1259 = vpop.f32.mrb[0].mxu0
  %1260 = vmatprep.mubr.f32.mxu0 0.0
  %1261 = vmatmul.mubr.f32.gmra.mrb[0].mxu0 %v1077
  %v1262 = vpop.f32.mrb[0].mxu0
  %v1263 = vadd.f32 %v1039, %v1262
  %v1264 = vpop.f32.mrb[0].mxu0
  %1265 = vmatprep.mubr.f32.mxu0 0.0
  %1266 = vmatmul.mubr.f32.gmra.mrb[0].mxu0 %v1080
  %v1267 = vpop.f32.mrb[0].mxu0
  %v1268 = vadd.f32 %v1039, %v1267
  %v1269 = vpop.f32.mrb[0].mxu0
  %1270 = vmatprep.mubr.f32.mxu0 0.0
  %1271 = vmatmul.mubr.f32.gmra.mrb[0].mxu0 %v1083
  %v1272 = vpop.f32.mrb[0].mxu0
  %v1273 = vadd.f32 %v1039, %v1272
  %v1274 = vpop.f32.mrb[0].mxu0
  %1275 = vmatprep.mubr.f32.mxu0 0.0
  %1276 = vmatmul.mubr.f32.gmra.mrb[0].mxu0 %v1086
  %v1277 = vpop.f32.mrb[0].mxu0
  %v1278 = vadd.f32 %v1039, %v1277
  %v1279 = vpop.f32.mrb[0].mxu0
  %1280 = vmatprep.mubr.f32.mxu0 0.0
  %1281 = vmatmul.mubr.f32.gmra.mrb[0].mxu0 %v1089
  %v1282 = vpop.f32.mrb[0].mxu0
  %v1283 = vadd.f32 %v1039, %v1282
  %v1284 = vpop.f32.mrb[0].mxu0
  %1285 = vmatprep.mubr.f32.mxu0 0.0
  %1286 = vmatmul.mubr.f32.gmra.mrb[0].mxu0 %v1092
  %v1287 = vpop.f32.mrb[0].mxu0
  %v1288 = vadd.f32 %v1039, %v1287
  %v1289 = vpop.f32.mrb[0].mxu0
  %1290 = vmatprep.mubr.f32.mxu0 0.0
  %1291 = vmatmul.mubr.f32.gmra.mrb[0].mxu0 %v1095
  %v1292 = vpop.f32.mrb[0].mxu0
  %v1293 = vadd.f32 %v1039, %v1292
  %v1294 = vpop.f32.mrb[0].mxu0
  %1295 = vmatprep.mubr.f32.mxu0 0.0
  %1296 = vmatmul.mubr.f32.gmra.mrb[0].mxu0 %v1098
  %v1297 = vpop.f32.mrb[0].mxu0
  %v1298 = vadd.f32 %v1039, %v1297
  %v1299 = vpop.f32.mrb[0].mxu0
  %1300 = vmatprep.mubr.f32.mxu0 0.0
  %1301 = vmatmul.mubr.f32.gmra.mrb[0].mxu0 %v1101
  %v1302 = vpop.f32.mrb[0].mxu0
  %v1303 = vadd.f32 %v1039, %v1302
  %v1304 = vpop.f32.mrb[0].mxu0
  %1305 = vmatprep.mubr.f32.mxu0 0.0
  %1306 = vmatmul.mubr.f32.gmra.mrb[0].mxu0 %v1104
  %v1307 = vpop.f32.mrb[0].mxu0
  %v1308 = vadd.f32 %v1039, %v1307
  %v1309 = vpop.f32.mrb[0].mxu0
  %1310 = vmatprep.mubr.f32.mxu0 0.0
  %1311 = vmatmul.mubr.f32.gmra.mrb[0].mxu0 %v1107
  %v1312 = vpop.f32.mrb[0].mxu0
  %v1313 = vadd.f32 %v1039, %v1312
  %v1314 = vpop.f32.mrb[0].mxu0
  %1315 = vmatprep.mubr.f32.mxu0 0.0
  %1316 = vmatmul.mubr.f32.gmra.mrb[0].mxu0 %v1110
  %v1317 = vpop.f32.mrb[0].mxu0
  %v1318 = vadd.f32 %v1039, %v1317
  %v1319 = vpop.f32.mrb[0].mxu0
  %1320 = vmatprep.mubr.f32.mxu0 0.0
  %1321 = vmatmul.mubr.f32.gmra.mrb[0].mxu0 %v1113
  %v1322 = vpop.f32.mrb[0].mxu0
  %v1323 = vadd.f32 %v1039, %v1322
  %v1324 = vpop.f32.mrb[0].mxu0
  %1325 = vmatprep.mubr.f32.mxu0 0.0
  %1326 = vmatmul.mubr.f32.gmra.mrb[0].mxu0 %v1116
  %v1327 = vpop.f32.mrb[0].mxu0
  %v1328 = vadd.f32 %v1039, %v1327
  %v1329 = vpop.f32.mrb[0].mxu0
  %1330 = vmatprep.mubr.f32.mxu0 0.0
  %1331 = vmatmul.mubr.f32.gmra.mrb[0].mxu0 %v1119
  %v1332 = vpop.f32.mrb[0].mxu0
  %v1333 = vadd.f32 %v1039, %v1332
  %v1334 = vpop.f32.mrb[0].mxu0
  %1335 = vmatprep.mubr.f32.mxu0 0.0
  %1336 = vmatmul.mubr.f32.gmra.mrb[0].mxu0 %v1122
  %v1337 = vpop.f32.mrb[0].mxu0
  %v1338 = vadd.f32 %v1039, %v1337
  %v1339 = vpop.f32.mrb[0].mxu0
  %1340 = vmatprep.mubr.f32.mxu0 0.0
  %1341 = vmatmul.mubr.f32.gmra.mrb[0].mxu0 %v1125
  %v1342 = vpop.f32.mrb[0].mxu0
  %v1343 = vadd.f32 %v1039, %v1342
  %v1344 = vpop.f32.mrb[0].mxu0
  %1345 = vmatprep.mubr.f32.mxu0 0.0
  %1346 = vmatmul.mubr.f32.gmra.mrb[0].mxu0 %v1128
  %v1347 = vpop.f32.mrb[0].mxu0
  %v1348 = vadd.f32 %v1039, %v1347
  %v1349 = vpop.f32.mrb[0].mxu0
  %1350 = vmatprep.mubr.f32.mxu0 0.0
  %1351 = vmatmul.mubr.f32.gmra.mrb[0].mxu0 %v1131
  %v1352 = vpop.f32.mrb[0].mxu0
  %v1353 = vadd.f32 %v1039, %v1352
  %v1354 = vpop.f32.mrb[0].mxu0
  %1355 = vmatprep.mubr.f32.mxu0 0.0
  %1356 = vmatmul.mubr.f32.gmra.mrb[0].mxu0 %v1134
  %v1357 = vpop.f32.mrb[0].mxu0
  %v1358 = vadd.f32 %v1039, %v1357
  %v1359 = vpop.f32.mrb[0].mxu0
  %1360 = vdwg.mxu0
  %v1361 = vsel %vm386, %v1203, 0.0
  %1362 = vadd.xlane.f32.xlu0 %v1361
  %v1363 = vpop.xlane.xlu0 %1362
  %v1364 = vsel %vm386, %v1208, 0.0
  %1365 = vadd.xlane.f32.xlu0 %v1364
  %v1366 = vpop.xlane.xlu0 %1365
  %v1367 = vsel %vm386, %v1213, 0.0
  %1368 = vadd.xlane.f32.xlu0 %v1367
  %v1369 = vpop.xlane.xlu0 %1368
  %v1370 = vsel %vm386, %v1218, 0.0
  %1371 = vadd.xlane.f32.xlu0 %v1370
  %v1372 = vpop.xlane.xlu0 %1371
  %v1373 = vsel %vm386, %v1223, 0.0
  %1374 = vadd.xlane.f32.xlu0 %v1373
  %v1375 = vpop.xlane.xlu0 %1374
  %v1376 = vsel %vm386, %v1228, 0.0
  %1377 = vadd.xlane.f32.xlu0 %v1376
  %v1378 = vpop.xlane.xlu0 %1377
  %v1379 = vsel %vm386, %v1233, 0.0
  %1380 = vadd.xlane.f32.xlu0 %v1379
  %v1381 = vpop.xlane.xlu0 %1380
  %v1382 = vsel %vm386, %v1238, 0.0
  %1383 = vadd.xlane.f32.xlu0 %v1382
  %v1384 = vpop.xlane.xlu0 %1383
  %v1385 = vsel %vm386, %v1243, 0.0
  %1386 = vadd.xlane.f32.xlu0 %v1385
  %v1387 = vpop.xlane.xlu0 %1386
  %v1388 = vsel %vm386, %v1248, 0.0
  %1389 = vadd.xlane.f32.xlu0 %v1388
  %v1390 = vpop.xlane.xlu0 %1389
  %v1391 = vsel %vm386, %v1253, 0.0
  %1392 = vadd.xlane.f32.xlu0 %v1391
  %v1393 = vpop.xlane.xlu0 %1392
  %v1394 = vsel %vm386, %v1258, 0.0
  %1395 = vadd.xlane.f32.xlu0 %v1394
  %v1396 = vpop.xlane.xlu0 %1395
  %v1397 = vsel %vm386, %v1263, 0.0
  %1398 = vadd.xlane.f32.xlu0 %v1397
  %v1399 = vpop.xlane.xlu0 %1398
  %v1400 = vsel %vm386, %v1268, 0.0
  %1401 = vadd.xlane.f32.xlu0 %v1400
  %v1402 = vpop.xlane.xlu0 %1401
  %v1403 = vsel %vm386, %v1273, 0.0
  %1404 = vadd.xlane.f32.xlu0 %v1403
  %v1405 = vpop.xlane.xlu0 %1404
  %v1406 = vsel %vm386, %v1278, 0.0
  %1407 = vadd.xlane.f32.xlu0 %v1406
  %v1408 = vpop.xlane.xlu0 %1407
  %v1409 = vsel %vm386, %v1283, 0.0
  %1410 = vadd.xlane.f32.xlu0 %v1409
  %v1411 = vpop.xlane.xlu0 %1410
  %v1412 = vsel %vm386, %v1288, 0.0
  %1413 = vadd.xlane.f32.xlu0 %v1412
  %v1414 = vpop.xlane.xlu0 %1413
  %v1415 = vsel %vm386, %v1293, 0.0
  %1416 = vadd.xlane.f32.xlu0 %v1415
  %v1417 = vpop.xlane.xlu0 %1416
  %v1418 = vsel %vm386, %v1298, 0.0
  %1419 = vadd.xlane.f32.xlu0 %v1418
  %v1420 = vpop.xlane.xlu0 %1419
  %v1421 = vsel %vm386, %v1303, 0.0
  %1422 = vadd.xlane.f32.xlu0 %v1421
  %v1423 = vpop.xlane.xlu0 %1422
  %v1424 = vsel %vm386, %v1308, 0.0
  %1425 = vadd.xlane.f32.xlu0 %v1424
  %v1426 = vpop.xlane.xlu0 %1425
  %v1427 = vsel %vm386, %v1313, 0.0
  %1428 = vadd.xlane.f32.xlu0 %v1427
  %v1429 = vpop.xlane.xlu0 %1428
  %v1430 = vsel %vm386, %v1318, 0.0
  %1431 = vadd.xlane.f32.xlu0 %v1430
  %v1432 = vpop.xlane.xlu0 %1431
  %v1433 = vsel %vm386, %v1323, 0.0
  %1434 = vadd.xlane.f32.xlu0 %v1433
  %v1435 = vpop.xlane.xlu0 %1434
  %v1436 = vsel %vm386, %v1328, 0.0
  %1437 = vadd.xlane.f32.xlu0 %v1436
  %v1438 = vpop.xlane.xlu0 %1437
  %v1439 = vsel %vm386, %v1333, 0.0
  %1440 = vadd.xlane.f32.xlu0 %v1439
  %v1441 = vpop.xlane.xlu0 %1440
  %v1442 = vsel %vm386, %v1338, 0.0
  %1443 = vadd.xlane.f32.xlu0 %v1442
  %v1444 = vpop.xlane.xlu0 %1443
  %v1445 = vsel %vm386, %v1343, 0.0
  %1446 = vadd.xlane.f32.xlu0 %v1445
  %v1447 = vpop.xlane.xlu0 %1446
  %v1448 = vsel %vm386, %v1348, 0.0
  %1449 = vadd.xlane.f32.xlu0 %v1448
  %v1450 = vpop.xlane.xlu0 %1449
  %v1451 = vsel %vm386, %v1353, 0.0
  %1452 = vadd.xlane.f32.xlu0 %v1451
  %v1453 = vpop.xlane.xlu0 %1452
  %v1454 = vsel %vm386, %v1358, 0.0
  %1455 = vadd.xlane.f32.xlu0 %v1454
  %v1456 = vpop.xlane.xlu0 %1455
  %v1457 = vmul.f32 %v1363, %v483
  %v1458 = vmul.f32 %v1366, %v483
  %v1459 = vmul.f32 %v1369, %v483
  %v1460 = vmul.f32 %v1372, %v483
  %v1461 = vmul.f32 %v1375, %v483
  %v1462 = vmul.f32 %v1378, %v483
  %v1463 = vmul.f32 %v1381, %v483
  %v1464 = vmul.f32 %v1384, %v483
  %v1465 = vmul.f32 %v1387, %v483
  %v1466 = vmul.f32 %v1390, %v483
  %v1467 = vmul.f32 %v1393, %v483
  %v1468 = vmul.f32 %v1396, %v483
  %v1469 = vmul.f32 %v1399, %v483
  %v1470 = vmul.f32 %v1402, %v483
  %v1471 = vmul.f32 %v1405, %v483
  %v1472 = vmul.f32 %v1408, %v483
  %v1473 = vmul.f32 %v1411, %v483
  %v1474 = vmul.f32 %v1414, %v483
  %v1475 = vmul.f32 %v1417, %v483
  %v1476 = vmul.f32 %v1420, %v483
  %v1477 = vmul.f32 %v1423, %v483
  %v1478 = vmul.f32 %v1426, %v483
  %v1479 = vmul.f32 %v1429, %v483
  %v1480 = vmul.f32 %v1432, %v483
  %v1481 = vmul.f32 %v1435, %v483
  %v1482 = vmul.f32 %v1438, %v483
  %v1483 = vmul.f32 %v1441, %v483
  %v1484 = vmul.f32 %v1444, %v483
  %v1485 = vmul.f32 %v1447, %v483
  %v1486 = vmul.f32 %v1450, %v483
  %v1487 = vmul.f32 %v1453, %v483
  %v1488 = vmul.f32 %v1456, %v483
  %v1489 = vsub.f32 %v1203, %v1457
  %v1490 = vsub.f32 %v1208, %v1458
  %v1491 = vsub.f32 %v1213, %v1459
  %v1492 = vsub.f32 %v1218, %v1460
  %v1493 = vsub.f32 %v1223, %v1461
  %v1494 = vsub.f32 %v1228, %v1462
  %v1495 = vsub.f32 %v1233, %v1463
  %v1496 = vsub.f32 %v1238, %v1464
  %v1497 = vsub.f32 %v1243, %v1465
  %v1498 = vsub.f32 %v1248, %v1466
  %v1499 = vsub.f32 %v1253, %v1467
  %v1500 = vsub.f32 %v1258, %v1468
  %v1501 = vsub.f32 %v1263, %v1469
  %v1502 = vsub.f32 %v1268, %v1470
  %v1503 = vsub.f32 %v1273, %v1471
  %v1504 = vsub.f32 %v1278, %v1472
  %v1505 = vsub.f32 %v1283, %v1473
  %v1506 = vsub.f32 %v1288, %v1474
  %v1507 = vsub.f32 %v1293, %v1475
  %v1508 = vsub.f32 %v1298, %v1476
  %v1509 = vsub.f32 %v1303, %v1477
  %v1510 = vsub.f32 %v1308, %v1478
  %v1511 = vsub.f32 %v1313, %v1479
  %v1512 = vsub.f32 %v1318, %v1480
  %v1513 = vsub.f32 %v1323, %v1481
  %v1514 = vsub.f32 %v1328, %v1482
  %v1515 = vsub.f32 %v1333, %v1483
  %v1516 = vsub.f32 %v1338, %v1484
  %v1517 = vsub.f32 %v1343, %v1485
  %v1518 = vsub.f32 %v1348, %v1486
  %v1519 = vsub.f32 %v1353, %v1487
  %v1520 = vsub.f32 %v1358, %v1488
  %v1521 = vmul.f32 %v1489, %v1489
  %v1522 = vmul.f32 %v1490, %v1490
  %v1523 = vmul.f32 %v1491, %v1491
  %v1524 = vmul.f32 %v1492, %v1492
  %v1525 = vmul.f32 %v1493, %v1493
  %v1526 = vmul.f32 %v1494, %v1494
  %v1527 = vmul.f32 %v1495, %v1495
  %v1528 = vmul.f32 %v1496, %v1496
  %v1529 = vmul.f32 %v1497, %v1497
  %v1530 = vmul.f32 %v1498, %v1498
  %v1531 = vmul.f32 %v1499, %v1499
  %v1532 = vmul.f32 %v1500, %v1500
  %v1533 = vmul.f32 %v1501, %v1501
  %v1534 = vmul.f32 %v1502, %v1502
  %v1535 = vmul.f32 %v1503, %v1503
  %v1536 = vmul.f32 %v1504, %v1504
  %v1537 = vmul.f32 %v1505, %v1505
  %v1538 = vmul.f32 %v1506, %v1506
  %v1539 = vmul.f32 %v1507, %v1507
  %v1540 = vmul.f32 %v1508, %v1508
  %v1541 = vmul.f32 %v1509, %v1509
  %v1542 = vmul.f32 %v1510, %v1510
  %v1543 = vmul.f32 %v1511, %v1511
  %v1544 = vmul.f32 %v1512, %v1512
  %v1545 = vmul.f32 %v1513, %v1513
  %v1546 = vmul.f32 %v1514, %v1514
  %v1547 = vmul.f32 %v1515, %v1515
  %v1548 = vmul.f32 %v1516, %v1516
  %v1549 = vmul.f32 %v1517, %v1517
  %v1550 = vmul.f32 %v1518, %v1518
  %v1551 = vmul.f32 %v1519, %v1519
  %v1552 = vmul.f32 %v1520, %v1520
  %v1553 = vsel %vm386, %v1521, 0.0
  %1554 = vadd.xlane.f32.xlu0 %v1553
  %v1555 = vpop.xlane.xlu0 %1554
  %v1556 = vsel %vm386, %v1522, 0.0
  %1557 = vadd.xlane.f32.xlu0 %v1556
  %v1558 = vpop.xlane.xlu0 %1557
  %v1559 = vsel %vm386, %v1523, 0.0
  %1560 = vadd.xlane.f32.xlu0 %v1559
  %v1561 = vpop.xlane.xlu0 %1560
  %v1562 = vsel %vm386, %v1524, 0.0
  %1563 = vadd.xlane.f32.xlu0 %v1562
  %v1564 = vpop.xlane.xlu0 %1563
  %v1565 = vsel %vm386, %v1525, 0.0
  %1566 = vadd.xlane.f32.xlu0 %v1565
  %v1567 = vpop.xlane.xlu0 %1566
  %v1568 = vsel %vm386, %v1526, 0.0
  %1569 = vadd.xlane.f32.xlu0 %v1568
  %v1570 = vpop.xlane.xlu0 %1569
  %v1571 = vsel %vm386, %v1527, 0.0
  %1572 = vadd.xlane.f32.xlu0 %v1571
  %v1573 = vpop.xlane.xlu0 %1572
  %v1574 = vsel %vm386, %v1528, 0.0
  %1575 = vadd.xlane.f32.xlu0 %v1574
  %v1576 = vpop.xlane.xlu0 %1575
  %v1577 = vsel %vm386, %v1529, 0.0
  %1578 = vadd.xlane.f32.xlu0 %v1577
  %v1579 = vpop.xlane.xlu0 %1578
  %v1580 = vsel %vm386, %v1530, 0.0
  %1581 = vadd.xlane.f32.xlu0 %v1580
  %v1582 = vpop.xlane.xlu0 %1581
  %v1583 = vsel %vm386, %v1531, 0.0
  %1584 = vadd.xlane.f32.xlu0 %v1583
  %v1585 = vpop.xlane.xlu0 %1584
  %v1586 = vsel %vm386, %v1532, 0.0
  %1587 = vadd.xlane.f32.xlu0 %v1586
  %v1588 = vpop.xlane.xlu0 %1587
  %v1589 = vsel %vm386, %v1533, 0.0
  %1590 = vadd.xlane.f32.xlu0 %v1589
  %v1591 = vpop.xlane.xlu0 %1590
  %v1592 = vsel %vm386, %v1534, 0.0
  %1593 = vadd.xlane.f32.xlu0 %v1592
  %v1594 = vpop.xlane.xlu0 %1593
  %v1595 = vsel %vm386, %v1535, 0.0
  %1596 = vadd.xlane.f32.xlu0 %v1595
  %v1597 = vpop.xlane.xlu0 %1596
  %v1598 = vsel %vm386, %v1536, 0.0
  %1599 = vadd.xlane.f32.xlu0 %v1598
  %v1600 = vpop.xlane.xlu0 %1599
  %v1601 = vsel %vm386, %v1537, 0.0
  %1602 = vadd.xlane.f32.xlu0 %v1601
  %v1603 = vpop.xlane.xlu0 %1602
  %v1604 = vsel %vm386, %v1538, 0.0
  %1605 = vadd.xlane.f32.xlu0 %v1604
  %v1606 = vpop.xlane.xlu0 %1605
  %v1607 = vsel %vm386, %v1539, 0.0
  %1608 = vadd.xlane.f32.xlu0 %v1607
  %v1609 = vpop.xlane.xlu0 %1608
  %v1610 = vsel %vm386, %v1540, 0.0
  %1611 = vadd.xlane.f32.xlu0 %v1610
  %v1612 = vpop.xlane.xlu0 %1611
  %v1613 = vsel %vm386, %v1541, 0.0
  %1614 = vadd.xlane.f32.xlu0 %v1613
  %v1615 = vpop.xlane.xlu0 %1614
  %v1616 = vsel %vm386, %v1542, 0.0
  %1617 = vadd.xlane.f32.xlu0 %v1616
  %v1618 = vpop.xlane.xlu0 %1617
  %v1619 = vsel %vm386, %v1543, 0.0
  %1620 = vadd.xlane.f32.xlu0 %v1619
  %v1621 = vpop.xlane.xlu0 %1620
  %v1622 = vsel %vm386, %v1544, 0.0
  %1623 = vadd.xlane.f32.xlu0 %v1622
  %v1624 = vpop.xlane.xlu0 %1623
  %v1625 = vsel %vm386, %v1545, 0.0
  %1626 = vadd.xlane.f32.xlu0 %v1625
  %v1627 = vpop.xlane.xlu0 %1626
  %v1628 = vsel %vm386, %v1546, 0.0
  %1629 = vadd.xlane.f32.xlu0 %v1628
  %v1630 = vpop.xlane.xlu0 %1629
  %v1631 = vsel %vm386, %v1547, 0.0
  %1632 = vadd.xlane.f32.xlu0 %v1631
  %v1633 = vpop.xlane.xlu0 %1632
  %v1634 = vsel %vm386, %v1548, 0.0
  %1635 = vadd.xlane.f32.xlu0 %v1634
  %v1636 = vpop.xlane.xlu0 %1635
  %v1637 = vsel %vm386, %v1549, 0.0
  %1638 = vadd.xlane.f32.xlu0 %v1637
  %v1639 = vpop.xlane.xlu0 %1638
  %v1640 = vsel %vm386, %v1550, 0.0
  %1641 = vadd.xlane.f32.xlu0 %v1640
  %v1642 = vpop.xlane.xlu0 %1641
  %v1643 = vsel %vm386, %v1551, 0.0
  %1644 = vadd.xlane.f32.xlu0 %v1643
  %v1645 = vpop.xlane.xlu0 %1644
  %v1646 = vsel %vm386, %v1552, 0.0
  %1647 = vadd.xlane.f32.xlu0 %v1646
  %v1648 = vpop.xlane.xlu0 %1647
  %v1649 = vmul.f32 %v1555, %v483
  %v1650 = vmul.f32 %v1558, %v483
  %v1651 = vmul.f32 %v1561, %v483
  %v1652 = vmul.f32 %v1564, %v483
  %v1653 = vmul.f32 %v1567, %v483
  %v1654 = vmul.f32 %v1570, %v483
  %v1655 = vmul.f32 %v1573, %v483
  %v1656 = vmul.f32 %v1576, %v483
  %v1657 = vmul.f32 %v1579, %v483
  %v1658 = vmul.f32 %v1582, %v483
  %v1659 = vmul.f32 %v1585, %v483
  %v1660 = vmul.f32 %v1588, %v483
  %v1661 = vmul.f32 %v1591, %v483
  %v1662 = vmul.f32 %v1594, %v483
  %v1663 = vmul.f32 %v1597, %v483
  %v1664 = vmul.f32 %v1600, %v483
  %v1665 = vmul.f32 %v1603, %v483
  %v1666 = vmul.f32 %v1606, %v483
  %v1667 = vmul.f32 %v1609, %v483
  %v1668 = vmul.f32 %v1612, %v483
  %v1669 = vmul.f32 %v1615, %v483
  %v1670 = vmul.f32 %v1618, %v483
  %v1671 = vmul.f32 %v1621, %v483
  %v1672 = vmul.f32 %v1624, %v483
  %v1673 = vmul.f32 %v1627, %v483
  %v1674 = vmul.f32 %v1630, %v483
  %v1675 = vmul.f32 %v1633, %v483
  %v1676 = vmul.f32 %v1636, %v483
  %v1677 = vmul.f32 %v1639, %v483
  %v1678 = vmul.f32 %v1642, %v483
  %v1679 = vmul.f32 %v1645, %v483
  %v1680 = vmul.f32 %v1648, %v483
  %v1681 = vadd.f32 %v1649, 1e-05
  %v1682 = vadd.f32 %v1650, 1e-05
  %v1683 = vadd.f32 %v1651, 1e-05
  %v1684 = vadd.f32 %v1652, 1e-05
  %v1685 = vadd.f32 %v1653, 1e-05
  %v1686 = vadd.f32 %v1654, 1e-05
  %v1687 = vadd.f32 %v1655, 1e-05
  %v1688 = vadd.f32 %v1656, 1e-05
  %v1689 = vadd.f32 %v1657, 1e-05
  %v1690 = vadd.f32 %v1658, 1e-05
  %v1691 = vadd.f32 %v1659, 1e-05
  %v1692 = vadd.f32 %v1660, 1e-05
  %v1693 = vadd.f32 %v1661, 1e-05
  %v1694 = vadd.f32 %v1662, 1e-05
  %v1695 = vadd.f32 %v1663, 1e-05
  %v1696 = vadd.f32 %v1664, 1e-05
  %v1697 = vadd.f32 %v1665, 1e-05
  %v1698 = vadd.f32 %v1666, 1e-05
  %v1699 = vadd.f32 %v1667, 1e-05
  %v1700 = vadd.f32 %v1668, 1e-05
  %v1701 = vadd.f32 %v1669, 1e-05
  %v1702 = vadd.f32 %v1670, 1e-05
  %v1703 = vadd.f32 %v1671, 1e-05
  %v1704 = vadd.f32 %v1672, 1e-05
  %v1705 = vadd.f32 %v1673, 1e-05
  %v1706 = vadd.f32 %v1674, 1e-05
  %v1707 = vadd.f32 %v1675, 1e-05
  %v1708 = vadd.f32 %v1676, 1e-05
  %v1709 = vadd.f32 %v1677, 1e-05
  %v1710 = vadd.f32 %v1678, 1e-05
  %v1711 = vadd.f32 %v1679, 1e-05
  %v1712 = vadd.f32 %v1680, 1e-05
  %v1713 = vrsqrt.pop %v1681
  %v1714 = vrsqrt.pop %v1682
  %v1715 = vrsqrt.pop %v1683
  %v1716 = vrsqrt.pop %v1684
  %v1717 = vrsqrt.pop %v1685
  %v1718 = vrsqrt.pop %v1686
  %v1719 = vrsqrt.pop %v1687
  %v1720 = vrsqrt.pop %v1688
  %v1721 = vrsqrt.pop %v1689
  %v1722 = vrsqrt.pop %v1690
  %v1723 = vrsqrt.pop %v1691
  %v1724 = vrsqrt.pop %v1692
  %v1725 = vrsqrt.pop %v1693
  %v1726 = vrsqrt.pop %v1694
  %v1727 = vrsqrt.pop %v1695
  %v1728 = vrsqrt.pop %v1696
  %v1729 = vrsqrt.pop %v1697
  %v1730 = vrsqrt.pop %v1698
  %v1731 = vrsqrt.pop %v1699
  %v1732 = vrsqrt.pop %v1700
  %v1733 = vrsqrt.pop %v1701
  %v1734 = vrsqrt.pop %v1702
  %v1735 = vrsqrt.pop %v1703
  %v1736 = vrsqrt.pop %v1704
  %v1737 = vrsqrt.pop %v1705
  %v1738 = vrsqrt.pop %v1706
  %v1739 = vrsqrt.pop %v1707
  %v1740 = vrsqrt.pop %v1708
  %v1741 = vrsqrt.pop %v1709
  %v1742 = vrsqrt.pop %v1710
  %v1743 = vrsqrt.pop %v1711
  %v1744 = vrsqrt.pop %v1712
  %v1745 = vmul.f32 %v1489, %v1713
  %v1746 = vmul.f32 %v1490, %v1714
  %v1747 = vmul.f32 %v1491, %v1715
  %v1748 = vmul.f32 %v1492, %v1716
  %v1749 = vmul.f32 %v1493, %v1717
  %v1750 = vmul.f32 %v1494, %v1718
  %v1751 = vmul.f32 %v1495, %v1719
  %v1752 = vmul.f32 %v1496, %v1720
  %v1753 = vmul.f32 %v1497, %v1721
  %v1754 = vmul.f32 %v1498, %v1722
  %v1755 = vmul.f32 %v1499, %v1723
  %v1756 = vmul.f32 %v1500, %v1724
  %v1757 = vmul.f32 %v1501, %v1725
  %v1758 = vmul.f32 %v1502, %v1726
  %v1759 = vmul.f32 %v1503, %v1727
  %v1760 = vmul.f32 %v1504, %v1728
  %v1761 = vmul.f32 %v1505, %v1729
  %v1762 = vmul.f32 %v1506, %v1730
  %v1763 = vmul.f32 %v1507, %v1731
  %v1764 = vmul.f32 %v1508, %v1732
  %v1765 = vmul.f32 %v1509, %v1733
  %v1766 = vmul.f32 %v1510, %v1734
  %v1767 = vmul.f32 %v1511, %v1735
  %v1768 = vmul.f32 %v1512, %v1736
  %v1769 = vmul.f32 %v1513, %v1737
  %v1770 = vmul.f32 %v1514, %v1738
  %v1771 = vmul.f32 %v1515, %v1739
  %v1772 = vmul.f32 %v1516, %v1740
  %v1773 = vmul.f32 %v1517, %v1741
  %v1774 = vmul.f32 %v1518, %v1742
  %v1775 = vmul.f32 %v1519, %v1743
  %v1776 = vmul.f32 %v1520, %v1744
  %v1777 = vlaneseq
  %v1778 = vshrl.u32 %v1777, 7
  %v1779 = vsub.s32 4, %v1778
  %v1780 = vrot.slane %v17, %v1779
  %v1781 = vmul.f32 %v1745, %v1780
  %v1782 = vmul.f32 %v1746, %v1780
  %v1783 = vmul.f32 %v1747, %v1780
  %v1784 = vmul.f32 %v1748, %v1780
  %v1785 = vmul.f32 %v1749, %v1780
  %v1786 = vmul.f32 %v1750, %v1780
  %v1787 = vmul.f32 %v1751, %v1780
  %v1788 = vmul.f32 %v1752, %v1780
  %v1789 = vmul.f32 %v1753, %v1780
  %v1790 = vmul.f32 %v1754, %v1780
  %v1791 = vmul.f32 %v1755, %v1780
  %v1792 = vmul.f32 %v1756, %v1780
  %v1793 = vmul.f32 %v1757, %v1780
  %v1794 = vmul.f32 %v1758, %v1780
  %v1795 = vmul.f32 %v1759, %v1780
  %v1796 = vmul.f32 %v1760, %v1780
  %v1797 = vmul.f32 %v1761, %v1780
  %v1798 = vmul.f32 %v1762, %v1780
  %v1799 = vmul.f32 %v1763, %v1780
  %v1800 = vmul.f32 %v1764, %v1780
  %v1801 = vmul.f32 %v1765, %v1780
  %v1802 = vmul.f32 %v1766, %v1780
  %v1803 = vmul.f32 %v1767, %v1780
  %v1804 = vmul.f32 %v1768, %v1780
  %v1805 = vmul.f32 %v1769, %v1780
  %v1806 = vmul.f32 %v1770, %v1780
  %v1807 = vmul.f32 %v1771, %v1780
  %v1808 = vmul.f32 %v1772, %v1780
  %v1809 = vmul.f32 %v1773, %v1780
  %v1810 = vmul.f32 %v1774, %v1780
  %v1811 = vmul.f32 %v1775, %v1780
  %v1812 = vmul.f32 %v1776, %v1780
  %v1813 = vlaneseq
  %v1814 = vshrl.u32 %v1813, 7
  %v1815 = vsub.s32 5, %v1814
  %v1816 = vrot.slane %v17, %v1815
  %v1817 = vadd.f32 %v1781, %v1816
  %v1818 = vadd.f32 %v1782, %v1816
  %v1819 = vadd.f32 %v1783, %v1816
  %v1820 = vadd.f32 %v1784, %v1816
  %v1821 = vadd.f32 %v1785, %v1816
  %v1822 = vadd.f32 %v1786, %v1816
  %v1823 = vadd.f32 %v1787, %v1816
  %v1824 = vadd.f32 %v1788, %v1816
  %v1825 = vadd.f32 %v1789, %v1816
  %v1826 = vadd.f32 %v1790, %v1816
  %v1827 = vadd.f32 %v1791, %v1816
  %v1828 = vadd.f32 %v1792, %v1816
  %v1829 = vadd.f32 %v1793, %v1816
  %v1830 = vadd.f32 %v1794, %v1816
  %v1831 = vadd.f32 %v1795, %v1816
  %v1832 = vadd.f32 %v1796, %v1816
  %v1833 = vadd.f32 %v1797, %v1816
  %v1834 = vadd.f32 %v1798, %v1816
  %v1835 = vadd.f32 %v1799, %v1816
  %v1836 = vadd.f32 %v1800, %v1816
  %v1837 = vadd.f32 %v1801, %v1816
  %v1838 = vadd.f32 %v1802, %v1816
  %v1839 = vadd.f32 %v1803, %v1816
  %v1840 = vadd.f32 %v1804, %v1816
  %v1841 = vadd.f32 %v1805, %v1816
  %v1842 = vadd.f32 %v1806, %v1816
  %v1843 = vadd.f32 %v1807, %v1816
  %v1844 = vadd.f32 %v1808, %v1816
  %v1845 = vadd.f32 %v1809, %v1816
  %v1846 = vadd.f32 %v1810, %v1816
  %v1847 = vadd.f32 %v1811, %v1816
  %v1848 = vadd.f32 %v1812, %v1816
  %v1849 = vmax.f32 %v1817, 0.0
  %v1850 = vmax.f32 %v1818, 0.0
  %v1851 = vmax.f32 %v1819, 0.0
  %v1852 = vmax.f32 %v1820, 0.0
  %v1853 = vmax.f32 %v1821, 0.0
  %v1854 = vmax.f32 %v1822, 0.0
  %v1855 = vmax.f32 %v1823, 0.0
  %v1856 = vmax.f32 %v1824, 0.0
  %v1857 = vmax.f32 %v1825, 0.0
  %v1858 = vmax.f32 %v1826, 0.0
  %v1859 = vmax.f32 %v1827, 0.0
  %v1860 = vmax.f32 %v1828, 0.0
  %v1861 = vmax.f32 %v1829, 0.0
  %v1862 = vmax.f32 %v1830, 0.0
  %v1863 = vmax.f32 %v1831, 0.0
  %v1864 = vmax.f32 %v1832, 0.0
  %v1865 = vmax.f32 %v1833, 0.0
  %v1866 = vmax.f32 %v1834, 0.0
  %v1867 = vmax.f32 %v1835, 0.0
  %v1868 = vmax.f32 %v1836, 0.0
  %v1869 = vmax.f32 %v1837, 0.0
  %v1870 = vmax.f32 %v1838, 0.0
  %v1871 = vmax.f32 %v1839, 0.0
  %v1872 = vmax.f32 %v1840, 0.0
  %v1873 = vmax.f32 %v1841, 0.0
  %v1874 = vmax.f32 %v1842, 0.0
  %v1875 = vmax.f32 %v1843, 0.0
  %v1876 = vmax.f32 %v1844, 0.0
  %v1877 = vmax.f32 %v1845, 0.0
  %v1878 = vmax.f32 %v1846, 0.0
  %v1879 = vmax.f32 %v1847, 0.0
  %v1880 = vmax.f32 %v1848, 0.0
  %v1881 = vlaneseq
  %v1882 = vshrl.u32 %v1881, 7
  %v1883 = vsub.s32 6, %v1882
  %v1884 = vrot.slane %v17, %v1883
  %v1886 = vsel %vm386, %v1849, 0
  %v1889 = vsel %vm386, %v1850, 0
  %v1892 = vsel %vm386, %v1851, 0
  %v1895 = vsel %vm386, %v1852, 0
  %v1898 = vsel %vm386, %v1853, 0
  %v1901 = vsel %vm386, %v1854, 0
  %v1904 = vsel %vm386, %v1855, 0
  %v1907 = vsel %vm386, %v1856, 0
  %v1910 = vsel %vm386, %v1857, 0
  %v1913 = vsel %vm386, %v1858, 0
  %v1916 = vsel %vm386, %v1859, 0
  %v1919 = vsel %vm386, %v1860, 0
  %v1922 = vsel %vm386, %v1861, 0
  %v1925 = vsel %vm386, %v1862, 0
  %v1928 = vsel %vm386, %v1863, 0
  %v1931 = vsel %vm386, %v1864, 0
  %v1934 = vsel %vm386, %v1865, 0
  %v1937 = vsel %vm386, %v1866, 0
  %v1940 = vsel %vm386, %v1867, 0
  %v1943 = vsel %vm386, %v1868, 0
  %v1946 = vsel %vm386, %v1869, 0
  %v1949 = vsel %vm386, %v1870, 0
  %v1952 = vsel %vm386, %v1871, 0
  %v1955 = vsel %vm386, %v1872, 0
  %v1958 = vsel %vm386, %v1873, 0
  %v1961 = vsel %vm386, %v1874, 0
  %v1964 = vsel %vm386, %v1875, 0
  %v1967 = vsel %vm386, %v1876, 0
  %v1970 = vsel %vm386, %v1877, 0
  %v1973 = vsel %vm386, %v1878, 0
  %v1976 = vsel %vm386, %v1879, 0
  %v1979 = vsel %vm386, %v1880, 0
  %1981 = vmatprep.subr.mxu0 0.0
  %1982 = vmatpush1.msra.mxu0 %v24
  %1983 = vmatprep.subr.mxu0 0.0
  %1984 = vmatpush1.msra.mxu0 %v25
  %1985 = vmatprep.subr.mxu0 0.0
  %1986 = vmatpush1.msra.mxu0 %v26
  %1987 = vmatprep.subr.mxu0 0.0
  %1988 = vmatpush1.msra.mxu0 %v27
  %1989 = vmatprep.subr.mxu0 0.0
  %1990 = vmatpush1.msra.mxu0 0.0
  %1991 = vmatprep.subr.mxu0 0.0
  %1992 = vmatpush1.msra.mxu0 0.0
  %1993 = vmatprep.subr.mxu0 0.0
  %1994 = vmatpush1.msra.mxu0 0.0
  %1995 = vmatprep.subr.mxu0 0.0
  %1996 = vmatpush1.msra.mxu0 0.0
  %1997 = vmatprep.subr.mxu0 0.0
  %1998 = vmatpush1.msra.mxu0 0.0
  %1999 = vmatprep.subr.mxu0 0.0
  %2000 = vmatpush1.msra.mxu0 0.0
  %2001 = vmatprep.subr.mxu0 0.0
  %2002 = vmatpush1.msra.mxu0 0.0
  %2003 = vmatprep.subr.mxu0 0.0
  %2004 = vmatpush1.msra.mxu0 0.0
  %2005 = vmatprep.subr.mxu0 0.0
  %2006 = vmatpush1.msra.mxu0 0.0
  %2007 = vmatprep.subr.mxu0 0.0
  %2008 = vmatpush1.msra.mxu0 0.0
  %2009 = vmatprep.subr.mxu0 0.0
  %2010 = vmatpush1.msra.mxu0 0.0
  %2011 = vmatprep.subr.mxu0 0.0
  %2012 = vmatpush1.msra.mxu0 0.0
  %2013 = vmatprep.subr.mxu0 0.0
  %2014 = vmatpush1.msra.mxu0 0.0
  %2015 = vmatprep.subr.mxu0 0.0
  %2016 = vmatpush1.msra.mxu0 0.0
  %2017 = vmatprep.subr.mxu0 0.0
  %2018 = vmatpush1.msra.mxu0 0.0
  %2019 = vmatprep.subr.mxu0 0.0
  %2020 = vmatpush1.msra.mxu0 0.0
  %2021 = vmatprep.subr.mxu0 0.0
  %2022 = vmatpush1.msra.mxu0 0.0
  %2023 = vmatprep.subr.mxu0 0.0
  %2024 = vmatpush1.msra.mxu0 0.0
  %2025 = vmatprep.subr.mxu0 0.0
  %2026 = vmatpush1.msra.mxu0 0.0
  %2027 = vmatprep.subr.mxu0 0.0
  %2028 = vmatpush1.msra.mxu0 0.0
  %2029 = vmatprep.subr.mxu0 0.0
  %2030 = vmatpush1.msra.mxu0 0.0
  %2031 = vmatprep.subr.mxu0 0.0
  %2032 = vmatpush1.msra.mxu0 0.0
  %2033 = vmatprep.subr.mxu0 0.0
  %2034 = vmatpush1.msra.mxu0 0.0
  %2035 = vmatprep.subr.mxu0 0.0
  %2036 = vmatpush1.msra.mxu0 0.0
  %2037 = vmatprep.subr.mxu0 0.0
  %2038 = vmatpush1.msra.mxu0 0.0
  %2039 = vmatprep.subr.mxu0 0.0
  %2040 = vmatpush1.msra.mxu0 0.0
  %2041 = vmatprep.subr.mxu0 0.0
  %2042 = vmatpush1.msra.mxu0 0.0
  %2043 = vmatprep.subr.mxu0 0.0
  %2044 = vmatpush1.msra.mxu0 0.0
  %2045 = vmatprep.mubr.f32.mxu0 0.0
  %2046 = vmatmul.mubr.f32.gmra.mrb[0].mxu0 %v1886
  %v2047 = vpop.f32.mrb[0].mxu0
  %v2048 = vadd.f32 %v1884, %v2047
  %v2049 = vpop.f32.mrb[0].mxu0
  %2050 = vmatprep.mubr.f32.mxu0 0.0
  %2051 = vmatmul.mubr.f32.gmra.mrb[0].mxu0 %v1889
  %v2052 = vpop.f32.mrb[0].mxu0
  %v2053 = vadd.f32 %v1884, %v2052
  %v2054 = vpop.f32.mrb[0].mxu0
  %2055 = vmatprep.mubr.f32.mxu0 0.0
  %2056 = vmatmul.mubr.f32.gmra.mrb[0].mxu0 %v1892
  %v2057 = vpop.f32.mrb[0].mxu0
  %v2058 = vadd.f32 %v1884, %v2057
  %v2059 = vpop.f32.mrb[0].mxu0
  %2060 = vmatprep.mubr.f32.mxu0 0.0
  %2061 = vmatmul.mubr.f32.gmra.mrb[0].mxu0 %v1895
  %v2062 = vpop.f32.mrb[0].mxu0
  %v2063 = vadd.f32 %v1884, %v2062
  %v2064 = vpop.f32.mrb[0].mxu0
  %2065 = vmatprep.mubr.f32.mxu0 0.0
  %2066 = vmatmul.mubr.f32.gmra.mrb[0].mxu0 %v1898
  %v2067 = vpop.f32.mrb[0].mxu0
  %v2068 = vadd.f32 %v1884, %v2067
  %v2069 = vpop.f32.mrb[0].mxu0
  %2070 = vmatprep.mubr.f32.mxu0 0.0
  %2071 = vmatmul.mubr.f32.gmra.mrb[0].mxu0 %v1901
  %v2072 = vpop.f32.mrb[0].mxu0
  %v2073 = vadd.f32 %v1884, %v2072
  %v2074 = vpop.f32.mrb[0].mxu0
  %2075 = vmatprep.mubr.f32.mxu0 0.0
  %2076 = vmatmul.mubr.f32.gmra.mrb[0].mxu0 %v1904
  %v2077 = vpop.f32.mrb[0].mxu0
  %v2078 = vadd.f32 %v1884, %v2077
  %v2079 = vpop.f32.mrb[0].mxu0
  %2080 = vmatprep.mubr.f32.mxu0 0.0
  %2081 = vmatmul.mubr.f32.gmra.mrb[0].mxu0 %v1907
  %v2082 = vpop.f32.mrb[0].mxu0
  %v2083 = vadd.f32 %v1884, %v2082
  %v2084 = vpop.f32.mrb[0].mxu0
  %2085 = vmatprep.mubr.f32.mxu0 0.0
  %2086 = vmatmul.mubr.f32.gmra.mrb[0].mxu0 %v1910
  %v2087 = vpop.f32.mrb[0].mxu0
  %v2088 = vadd.f32 %v1884, %v2087
  %v2089 = vpop.f32.mrb[0].mxu0
  %2090 = vmatprep.mubr.f32.mxu0 0.0
  %2091 = vmatmul.mubr.f32.gmra.mrb[0].mxu0 %v1913
  %v2092 = vpop.f32.mrb[0].mxu0
  %v2093 = vadd.f32 %v1884, %v2092
  %v2094 = vpop.f32.mrb[0].mxu0
  %2095 = vmatprep.mubr.f32.mxu0 0.0
  %2096 = vmatmul.mubr.f32.gmra.mrb[0].mxu0 %v1916
  %v2097 = vpop.f32.mrb[0].mxu0
  %v2098 = vadd.f32 %v1884, %v2097
  %v2099 = vpop.f32.mrb[0].mxu0
  %2100 = vmatprep.mubr.f32.mxu0 0.0
  %2101 = vmatmul.mubr.f32.gmra.mrb[0].mxu0 %v1919
  %v2102 = vpop.f32.mrb[0].mxu0
  %v2103 = vadd.f32 %v1884, %v2102
  %v2104 = vpop.f32.mrb[0].mxu0
  %2105 = vmatprep.mubr.f32.mxu0 0.0
  %2106 = vmatmul.mubr.f32.gmra.mrb[0].mxu0 %v1922
  %v2107 = vpop.f32.mrb[0].mxu0
  %v2108 = vadd.f32 %v1884, %v2107
  %v2109 = vpop.f32.mrb[0].mxu0
  %2110 = vmatprep.mubr.f32.mxu0 0.0
  %2111 = vmatmul.mubr.f32.gmra.mrb[0].mxu0 %v1925
  %v2112 = vpop.f32.mrb[0].mxu0
  %v2113 = vadd.f32 %v1884, %v2112
  %v2114 = vpop.f32.mrb[0].mxu0
  %2115 = vmatprep.mubr.f32.mxu0 0.0
  %2116 = vmatmul.mubr.f32.gmra.mrb[0].mxu0 %v1928
  %v2117 = vpop.f32.mrb[0].mxu0
  %v2118 = vadd.f32 %v1884, %v2117
  %v2119 = vpop.f32.mrb[0].mxu0
  %2120 = vmatprep.mubr.f32.mxu0 0.0
  %2121 = vmatmul.mubr.f32.gmra.mrb[0].mxu0 %v1931
  %v2122 = vpop.f32.mrb[0].mxu0
  %v2123 = vadd.f32 %v1884, %v2122
  %v2124 = vpop.f32.mrb[0].mxu0
  %2125 = vmatprep.mubr.f32.mxu0 0.0
  %2126 = vmatmul.mubr.f32.gmra.mrb[0].mxu0 %v1934
  %v2127 = vpop.f32.mrb[0].mxu0
  %v2128 = vadd.f32 %v1884, %v2127
  %v2129 = vpop.f32.mrb[0].mxu0
  %2130 = vmatprep.mubr.f32.mxu0 0.0
  %2131 = vmatmul.mubr.f32.gmra.mrb[0].mxu0 %v1937
  %v2132 = vpop.f32.mrb[0].mxu0
  %v2133 = vadd.f32 %v1884, %v2132
  %v2134 = vpop.f32.mrb[0].mxu0
  %2135 = vmatprep.mubr.f32.mxu0 0.0
  %2136 = vmatmul.mubr.f32.gmra.mrb[0].mxu0 %v1940
  %v2137 = vpop.f32.mrb[0].mxu0
  %v2138 = vadd.f32 %v1884, %v2137
  %v2139 = vpop.f32.mrb[0].mxu0
  %2140 = vmatprep.mubr.f32.mxu0 0.0
  %2141 = vmatmul.mubr.f32.gmra.mrb[0].mxu0 %v1943
  %v2142 = vpop.f32.mrb[0].mxu0
  %v2143 = vadd.f32 %v1884, %v2142
  %v2144 = vpop.f32.mrb[0].mxu0
  %2145 = vmatprep.mubr.f32.mxu0 0.0
  %2146 = vmatmul.mubr.f32.gmra.mrb[0].mxu0 %v1946
  %v2147 = vpop.f32.mrb[0].mxu0
  %v2148 = vadd.f32 %v1884, %v2147
  %v2149 = vpop.f32.mrb[0].mxu0
  %2150 = vmatprep.mubr.f32.mxu0 0.0
  %2151 = vmatmul.mubr.f32.gmra.mrb[0].mxu0 %v1949
  %v2152 = vpop.f32.mrb[0].mxu0
  %v2153 = vadd.f32 %v1884, %v2152
  %v2154 = vpop.f32.mrb[0].mxu0
  %2155 = vmatprep.mubr.f32.mxu0 0.0
  %2156 = vmatmul.mubr.f32.gmra.mrb[0].mxu0 %v1952
  %v2157 = vpop.f32.mrb[0].mxu0
  %v2158 = vadd.f32 %v1884, %v2157
  %v2159 = vpop.f32.mrb[0].mxu0
  %2160 = vmatprep.mubr.f32.mxu0 0.0
  %2161 = vmatmul.mubr.f32.gmra.mrb[0].mxu0 %v1955
  %v2162 = vpop.f32.mrb[0].mxu0
  %v2163 = vadd.f32 %v1884, %v2162
  %v2164 = vpop.f32.mrb[0].mxu0
  %2165 = vmatprep.mubr.f32.mxu0 0.0
  %2166 = vmatmul.mubr.f32.gmra.mrb[0].mxu0 %v1958
  %v2167 = vpop.f32.mrb[0].mxu0
  %v2168 = vadd.f32 %v1884, %v2167
  %v2169 = vpop.f32.mrb[0].mxu0
  %2170 = vmatprep.mubr.f32.mxu0 0.0
  %2171 = vmatmul.mubr.f32.gmra.mrb[0].mxu0 %v1961
  %v2172 = vpop.f32.mrb[0].mxu0
  %v2173 = vadd.f32 %v1884, %v2172
  %v2174 = vpop.f32.mrb[0].mxu0
  %2175 = vmatprep.mubr.f32.mxu0 0.0
  %2176 = vmatmul.mubr.f32.gmra.mrb[0].mxu0 %v1964
  %v2177 = vpop.f32.mrb[0].mxu0
  %v2178 = vadd.f32 %v1884, %v2177
  %v2179 = vpop.f32.mrb[0].mxu0
  %2180 = vmatprep.mubr.f32.mxu0 0.0
  %2181 = vmatmul.mubr.f32.gmra.mrb[0].mxu0 %v1967
  %v2182 = vpop.f32.mrb[0].mxu0
  %v2183 = vadd.f32 %v1884, %v2182
  %v2184 = vpop.f32.mrb[0].mxu0
  %2185 = vmatprep.mubr.f32.mxu0 0.0
  %2186 = vmatmul.mubr.f32.gmra.mrb[0].mxu0 %v1970
  %v2187 = vpop.f32.mrb[0].mxu0
  %v2188 = vadd.f32 %v1884, %v2187
  %v2189 = vpop.f32.mrb[0].mxu0
  %2190 = vmatprep.mubr.f32.mxu0 0.0
  %2191 = vmatmul.mubr.f32.gmra.mrb[0].mxu0 %v1973
  %v2192 = vpop.f32.mrb[0].mxu0
  %v2193 = vadd.f32 %v1884, %v2192
  %v2194 = vpop.f32.mrb[0].mxu0
  %2195 = vmatprep.mubr.f32.mxu0 0.0
  %2196 = vmatmul.mubr.f32.gmra.mrb[0].mxu0 %v1976
  %v2197 = vpop.f32.mrb[0].mxu0
  %v2198 = vadd.f32 %v1884, %v2197
  %v2199 = vpop.f32.mrb[0].mxu0
  %2200 = vmatprep.mubr.f32.mxu0 0.0
  %2201 = vmatmul.mubr.f32.gmra.mrb[0].mxu0 %v1979
  %v2202 = vpop.f32.mrb[0].mxu0
  %v2203 = vadd.f32 %v1884, %v2202
  %v2204 = vpop.f32.mrb[0].mxu0
  %2205 = vdwg.mxu0
  %v2206 = vmax.f32 %v2048, 0.0
  %v2207 = vmax.f32 %v2053, 0.0
  %v2208 = vmax.f32 %v2058, 0.0
  %v2209 = vmax.f32 %v2063, 0.0
  %v2210 = vmax.f32 %v2068, 0.0
  %v2211 = vmax.f32 %v2073, 0.0
  %v2212 = vmax.f32 %v2078, 0.0
  %v2213 = vmax.f32 %v2083, 0.0
  %v2214 = vmax.f32 %v2088, 0.0
  %v2215 = vmax.f32 %v2093, 0.0
  %v2216 = vmax.f32 %v2098, 0.0
  %v2217 = vmax.f32 %v2103, 0.0
  %v2218 = vmax.f32 %v2108, 0.0
  %v2219 = vmax.f32 %v2113, 0.0
  %v2220 = vmax.f32 %v2118, 0.0
  %v2221 = vmax.f32 %v2123, 0.0
  %v2222 = vmax.f32 %v2128, 0.0
  %v2223 = vmax.f32 %v2133, 0.0
  %v2224 = vmax.f32 %v2138, 0.0
  %v2225 = vmax.f32 %v2143, 0.0
  %v2226 = vmax.f32 %v2148, 0.0
  %v2227 = vmax.f32 %v2153, 0.0
  %v2228 = vmax.f32 %v2158, 0.0
  %v2229 = vmax.f32 %v2163, 0.0
  %v2230 = vmax.f32 %v2168, 0.0
  %v2231 = vmax.f32 %v2173, 0.0
  %v2232 = vmax.f32 %v2178, 0.0
  %v2233 = vmax.f32 %v2183, 0.0
  %v2234 = vmax.f32 %v2188, 0.0
  %v2235 = vmax.f32 %v2193, 0.0
  %v2236 = vmax.f32 %v2198, 0.0
  %v2237 = vmax.f32 %v2203, 0.0
  %v2238 = vld [vmem:[%s2] sm:$0xff]
  %v2239 = vld [vmem:[%s2 + $0x8] sm:$0xff]
  %v2240 = vld [vmem:[%s2 + $0x10] sm:$0xff]
  %v2241 = vld [vmem:[%s2 + $0x18] sm:$0xff]
  %v2242 = vlaneseq
  %v2243 = vshrl.u32 %v2242, 7
  %v2244 = vsub.s32 7, %v2243
  %v2245 = vrot.slane %v17, %v2244
  %v2247 = vsel %vm386, %v2206, 0
  %v2250 = vsel %vm386, %v2207, 0
  %v2253 = vsel %vm386, %v2208, 0
  %v2256 = vsel %vm386, %v2209, 0
  %v2259 = vsel %vm386, %v2210, 0
  %v2262 = vsel %vm386, %v2211, 0
  %v2265 = vsel %vm386, %v2212, 0
  %v2268 = vsel %vm386, %v2213, 0
  %v2271 = vsel %vm386, %v2214, 0
  %v2274 = vsel %vm386, %v2215, 0
  %v2277 = vsel %vm386, %v2216, 0
  %v2280 = vsel %vm386, %v2217, 0
  %v2283 = vsel %vm386, %v2218, 0
  %v2286 = vsel %vm386, %v2219, 0
  %v2289 = vsel %vm386, %v2220, 0
  %v2292 = vsel %vm386, %v2221, 0
  %v2295 = vsel %vm386, %v2222, 0
  %v2298 = vsel %vm386, %v2223, 0
  %v2301 = vsel %vm386, %v2224, 0
  %v2304 = vsel %vm386, %v2225, 0
  %v2307 = vsel %vm386, %v2226, 0
  %v2310 = vsel %vm386, %v2227, 0
  %v2313 = vsel %vm386, %v2228, 0
  %v2316 = vsel %vm386, %v2229, 0
  %v2319 = vsel %vm386, %v2230, 0
  %v2322 = vsel %vm386, %v2231, 0
  %v2325 = vsel %vm386, %v2232, 0
  %v2328 = vsel %vm386, %v2233, 0
  %v2331 = vsel %vm386, %v2234, 0
  %v2334 = vsel %vm386, %v2235, 0
  %v2337 = vsel %vm386, %v2236, 0
  %v2340 = vsel %vm386, %v2237, 0
  %2342 = vmatprep.subr.mxu0 0.0
  %2343 = vmatpush1.msra.mxu0 %v2238
  %2344 = vmatprep.subr.mxu0 0.0
  %2345 = vmatpush1.msra.mxu0 %v2239
  %2346 = vmatprep.subr.mxu0 0.0
  %2347 = vmatpush1.msra.mxu0 %v2240
  %2348 = vmatprep.subr.mxu0 0.0
  %2349 = vmatpush1.msra.mxu0 %v2241
  %2350 = vmatprep.subr.mxu0 0.0
  %2351 = vmatpush1.msra.mxu0 0.0
  %2352 = vmatprep.subr.mxu0 0.0
  %2353 = vmatpush1.msra.mxu0 0.0
  %2354 = vmatprep.subr.mxu0 0.0
  %2355 = vmatpush1.msra.mxu0 0.0
  %2356 = vmatprep.subr.mxu0 0.0
  %2357 = vmatpush1.msra.mxu0 0.0
  %2358 = vmatprep.subr.mxu0 0.0
  %2359 = vmatpush1.msra.mxu0 0.0
  %2360 = vmatprep.subr.mxu0 0.0
  %2361 = vmatpush1.msra.mxu0 0.0
  %2362 = vmatprep.subr.mxu0 0.0
  %2363 = vmatpush1.msra.mxu0 0.0
  %2364 = vmatprep.subr.mxu0 0.0
  %2365 = vmatpush1.msra.mxu0 0.0
  %2366 = vmatprep.subr.mxu0 0.0
  %2367 = vmatpush1.msra.mxu0 0.0
  %2368 = vmatprep.subr.mxu0 0.0
  %2369 = vmatpush1.msra.mxu0 0.0
  %2370 = vmatprep.subr.mxu0 0.0
  %2371 = vmatpush1.msra.mxu0 0.0
  %2372 = vmatprep.subr.mxu0 0.0
  %2373 = vmatpush1.msra.mxu0 0.0
  %2374 = vmatprep.subr.mxu0 0.0
  %2375 = vmatpush1.msra.mxu0 0.0
  %2376 = vmatprep.subr.mxu0 0.0
  %2377 = vmatpush1.msra.mxu0 0.0
  %2378 = vmatprep.subr.mxu0 0.0
  %2379 = vmatpush1.msra.mxu0 0.0
  %2380 = vmatprep.subr.mxu0 0.0
  %2381 = vmatpush1.msra.mxu0 0.0
  %2382 = vmatprep.subr.mxu0 0.0
  %2383 = vmatpush1.msra.mxu0 0.0
  %2384 = vmatprep.subr.mxu0 0.0
  %2385 = vmatpush1.msra.mxu0 0.0
  %2386 = vmatprep.subr.mxu0 0.0
  %2387 = vmatpush1.msra.mxu0 0.0
  %2388 = vmatprep.subr.mxu0 0.0
  %2389 = vmatpush1.msra.mxu0 0.0
  %2390 = vmatprep.subr.mxu0 0.0
  %2391 = vmatpush1.msra.mxu0 0.0
  %2392 = vmatprep.subr.mxu0 0.0
  %2393 = vmatpush1.msra.mxu0 0.0
  %2394 = vmatprep.subr.mxu0 0.0
  %2395 = vmatpush1.msra.mxu0 0.0
  %2396 = vmatprep.subr.mxu0 0.0
  %2397 = vmatpush1.msra.mxu0 0.0
  %2398 = vmatprep.subr.mxu0 0.0
  %2399 = vmatpush1.msra.mxu0 0.0
  %2400 = vmatprep.subr.mxu0 0.0
  %2401 = vmatpush1.msra.mxu0 0.0
  %2402 = vmatprep.subr.mxu0 0.0
  %2403 = vmatpush1.msra.mxu0 0.0
  %2404 = vmatprep.subr.mxu0 0.0
  %2405 = vmatpush1.msra.mxu0 0.0
  %2406 = vmatprep.mubr.f32.mxu0 0.0
  %2407 = vmatmul.mubr.f32.gmra.mrb[0].mxu0 %v2247
  %v2408 = vpop.f32.mrb[0].mxu0
  %v2409 = vadd.f32 %v2245, %v2408
  %v2410 = vpop.f32.mrb[0].mxu0
  %2411 = vmatprep.mubr.f32.mxu0 0.0
  %2412 = vmatmul.mubr.f32.gmra.mrb[0].mxu0 %v2250
  %v2413 = vpop.f32.mrb[0].mxu0
  %v2414 = vadd.f32 %v2245, %v2413
  %v2415 = vpop.f32.mrb[0].mxu0
  %2416 = vmatprep.mubr.f32.mxu0 0.0
  %2417 = vmatmul.mubr.f32.gmra.mrb[0].mxu0 %v2253
  %v2418 = vpop.f32.mrb[0].mxu0
  %v2419 = vadd.f32 %v2245, %v2418
  %v2420 = vpop.f32.mrb[0].mxu0
  %2421 = vmatprep.mubr.f32.mxu0 0.0
  %2422 = vmatmul.mubr.f32.gmra.mrb[0].mxu0 %v2256
  %v2423 = vpop.f32.mrb[0].mxu0
  %v2424 = vadd.f32 %v2245, %v2423
  %v2425 = vpop.f32.mrb[0].mxu0
  %2426 = vmatprep.mubr.f32.mxu0 0.0
  %2427 = vmatmul.mubr.f32.gmra.mrb[0].mxu0 %v2259
  %v2428 = vpop.f32.mrb[0].mxu0
  %v2429 = vadd.f32 %v2245, %v2428
  %v2430 = vpop.f32.mrb[0].mxu0
  %2431 = vmatprep.mubr.f32.mxu0 0.0
  %2432 = vmatmul.mubr.f32.gmra.mrb[0].mxu0 %v2262
  %v2433 = vpop.f32.mrb[0].mxu0
  %v2434 = vadd.f32 %v2245, %v2433
  %v2435 = vpop.f32.mrb[0].mxu0
  %2436 = vmatprep.mubr.f32.mxu0 0.0
  %2437 = vmatmul.mubr.f32.gmra.mrb[0].mxu0 %v2265
  %v2438 = vpop.f32.mrb[0].mxu0
  %v2439 = vadd.f32 %v2245, %v2438
  %v2440 = vpop.f32.mrb[0].mxu0
  %2441 = vmatprep.mubr.f32.mxu0 0.0
  %2442 = vmatmul.mubr.f32.gmra.mrb[0].mxu0 %v2268
  %v2443 = vpop.f32.mrb[0].mxu0
  %v2444 = vadd.f32 %v2245, %v2443
  %v2445 = vpop.f32.mrb[0].mxu0
  %2446 = vmatprep.mubr.f32.mxu0 0.0
  %2447 = vmatmul.mubr.f32.gmra.mrb[0].mxu0 %v2271
  %v2448 = vpop.f32.mrb[0].mxu0
  %v2449 = vadd.f32 %v2245, %v2448
  %v2450 = vpop.f32.mrb[0].mxu0
  %2451 = vmatprep.mubr.f32.mxu0 0.0
  %2452 = vmatmul.mubr.f32.gmra.mrb[0].mxu0 %v2274
  %v2453 = vpop.f32.mrb[0].mxu0
  %v2454 = vadd.f32 %v2245, %v2453
  %v2455 = vpop.f32.mrb[0].mxu0
  %2456 = vmatprep.mubr.f32.mxu0 0.0
  %2457 = vmatmul.mubr.f32.gmra.mrb[0].mxu0 %v2277
  %v2458 = vpop.f32.mrb[0].mxu0
  %v2459 = vadd.f32 %v2245, %v2458
  %v2460 = vpop.f32.mrb[0].mxu0
  %2461 = vmatprep.mubr.f32.mxu0 0.0
  %2462 = vmatmul.mubr.f32.gmra.mrb[0].mxu0 %v2280
  %v2463 = vpop.f32.mrb[0].mxu0
  %v2464 = vadd.f32 %v2245, %v2463
  %v2465 = vpop.f32.mrb[0].mxu0
  %2466 = vmatprep.mubr.f32.mxu0 0.0
  %2467 = vmatmul.mubr.f32.gmra.mrb[0].mxu0 %v2283
  %v2468 = vpop.f32.mrb[0].mxu0
  %v2469 = vadd.f32 %v2245, %v2468
  %v2470 = vpop.f32.mrb[0].mxu0
  %2471 = vmatprep.mubr.f32.mxu0 0.0
  %2472 = vmatmul.mubr.f32.gmra.mrb[0].mxu0 %v2286
  %v2473 = vpop.f32.mrb[0].mxu0
  %v2474 = vadd.f32 %v2245, %v2473
  %v2475 = vpop.f32.mrb[0].mxu0
  %2476 = vmatprep.mubr.f32.mxu0 0.0
  %2477 = vmatmul.mubr.f32.gmra.mrb[0].mxu0 %v2289
  %v2478 = vpop.f32.mrb[0].mxu0
  %v2479 = vadd.f32 %v2245, %v2478
  %v2480 = vpop.f32.mrb[0].mxu0
  %2481 = vmatprep.mubr.f32.mxu0 0.0
  %2482 = vmatmul.mubr.f32.gmra.mrb[0].mxu0 %v2292
  %v2483 = vpop.f32.mrb[0].mxu0
  %v2484 = vadd.f32 %v2245, %v2483
  %v2485 = vpop.f32.mrb[0].mxu0
  %2486 = vmatprep.mubr.f32.mxu0 0.0
  %2487 = vmatmul.mubr.f32.gmra.mrb[0].mxu0 %v2295
  %v2488 = vpop.f32.mrb[0].mxu0
  %v2489 = vadd.f32 %v2245, %v2488
  %v2490 = vpop.f32.mrb[0].mxu0
  %2491 = vmatprep.mubr.f32.mxu0 0.0
  %2492 = vmatmul.mubr.f32.gmra.mrb[0].mxu0 %v2298
  %v2493 = vpop.f32.mrb[0].mxu0
  %v2494 = vadd.f32 %v2245, %v2493
  %v2495 = vpop.f32.mrb[0].mxu0
  %2496 = vmatprep.mubr.f32.mxu0 0.0
  %2497 = vmatmul.mubr.f32.gmra.mrb[0].mxu0 %v2301
  %v2498 = vpop.f32.mrb[0].mxu0
  %v2499 = vadd.f32 %v2245, %v2498
  %v2500 = vpop.f32.mrb[0].mxu0
  %2501 = vmatprep.mubr.f32.mxu0 0.0
  %2502 = vmatmul.mubr.f32.gmra.mrb[0].mxu0 %v2304
  %v2503 = vpop.f32.mrb[0].mxu0
  %v2504 = vadd.f32 %v2245, %v2503
  %v2505 = vpop.f32.mrb[0].mxu0
  %2506 = vmatprep.mubr.f32.mxu0 0.0
  %2507 = vmatmul.mubr.f32.gmra.mrb[0].mxu0 %v2307
  %v2508 = vpop.f32.mrb[0].mxu0
  %v2509 = vadd.f32 %v2245, %v2508
  %v2510 = vpop.f32.mrb[0].mxu0
  %2511 = vmatprep.mubr.f32.mxu0 0.0
  %2512 = vmatmul.mubr.f32.gmra.mrb[0].mxu0 %v2310
  %v2513 = vpop.f32.mrb[0].mxu0
  %v2514 = vadd.f32 %v2245, %v2513
  %v2515 = vpop.f32.mrb[0].mxu0
  %2516 = vmatprep.mubr.f32.mxu0 0.0
  %2517 = vmatmul.mubr.f32.gmra.mrb[0].mxu0 %v2313
  %v2518 = vpop.f32.mrb[0].mxu0
  %v2519 = vadd.f32 %v2245, %v2518
  %v2520 = vpop.f32.mrb[0].mxu0
  %2521 = vmatprep.mubr.f32.mxu0 0.0
  %2522 = vmatmul.mubr.f32.gmra.mrb[0].mxu0 %v2316
  %v2523 = vpop.f32.mrb[0].mxu0
  %v2524 = vadd.f32 %v2245, %v2523
  %v2525 = vpop.f32.mrb[0].mxu0
  %2526 = vmatprep.mubr.f32.mxu0 0.0
  %2527 = vmatmul.mubr.f32.gmra.mrb[0].mxu0 %v2319
  %v2528 = vpop.f32.mrb[0].mxu0
  %v2529 = vadd.f32 %v2245, %v2528
  %v2530 = vpop.f32.mrb[0].mxu0
  %2531 = vmatprep.mubr.f32.mxu0 0.0
  %2532 = vmatmul.mubr.f32.gmra.mrb[0].mxu0 %v2322
  %v2533 = vpop.f32.mrb[0].mxu0
  %v2534 = vadd.f32 %v2245, %v2533
  %v2535 = vpop.f32.mrb[0].mxu0
  %2536 = vmatprep.mubr.f32.mxu0 0.0
  %2537 = vmatmul.mubr.f32.gmra.mrb[0].mxu0 %v2325
  %v2538 = vpop.f32.mrb[0].mxu0
  %v2539 = vadd.f32 %v2245, %v2538
  %v2540 = vpop.f32.mrb[0].mxu0
  %2541 = vmatprep.mubr.f32.mxu0 0.0
  %2542 = vmatmul.mubr.f32.gmra.mrb[0].mxu0 %v2328
  %v2543 = vpop.f32.mrb[0].mxu0
  %v2544 = vadd.f32 %v2245, %v2543
  %v2545 = vpop.f32.mrb[0].mxu0
  %2546 = vmatprep.mubr.f32.mxu0 0.0
  %2547 = vmatmul.mubr.f32.gmra.mrb[0].mxu0 %v2331
  %v2548 = vpop.f32.mrb[0].mxu0
  %v2549 = vadd.f32 %v2245, %v2548
  %v2550 = vpop.f32.mrb[0].mxu0
  %2551 = vmatprep.mubr.f32.mxu0 0.0
  %2552 = vmatmul.mubr.f32.gmra.mrb[0].mxu0 %v2334
  %v2553 = vpop.f32.mrb[0].mxu0
  %v2554 = vadd.f32 %v2245, %v2553
  %v2555 = vpop.f32.mrb[0].mxu0
  %2556 = vmatprep.mubr.f32.mxu0 0.0
  %2557 = vmatmul.mubr.f32.gmra.mrb[0].mxu0 %v2337
  %v2558 = vpop.f32.mrb[0].mxu0
  %v2559 = vadd.f32 %v2245, %v2558
  %v2560 = vpop.f32.mrb[0].mxu0
  %2561 = vmatprep.mubr.f32.mxu0 0.0
  %2562 = vmatmul.mubr.f32.gmra.mrb[0].mxu0 %v2340
  %v2563 = vpop.f32.mrb[0].mxu0
  %v2564 = vadd.f32 %v2245, %v2563
  %v2565 = vpop.f32.mrb[0].mxu0
  %2566 = vdwg.mxu0
  %vm2567 = vcmask 64512
  %2568 = vst.msk [vmem:[%s4] sm:$0xff] %vm2567, %v2409
  %2569 = vst.msk [vmem:[%s4 + $0x8] sm:$0xff] %vm2567, %v2414
  %2570 = vst.msk [vmem:[%s4 + $0x10] sm:$0xff] %vm2567, %v2419
  %2571 = vst.msk [vmem:[%s4 + $0x18] sm:$0xff] %vm2567, %v2424
  %2572 = vst.msk [vmem:[%s4 + $0x20] sm:$0xff] %vm2567, %v2429
  %2573 = vst.msk [vmem:[%s4 + $0x28] sm:$0xff] %vm2567, %v2434
  %2574 = vst.msk [vmem:[%s4 + $0x30] sm:$0xff] %vm2567, %v2439
  %2575 = vst.msk [vmem:[%s4 + $0x38] sm:$0xff] %vm2567, %v2444
  %2576 = vst.msk [vmem:[%s4 + $0x40] sm:$0xff] %vm2567, %v2449
  %2577 = vst.msk [vmem:[%s4 + $0x48] sm:$0xff] %vm2567, %v2454
  %2578 = vst.msk [vmem:[%s4 + $0x50] sm:$0xff] %vm2567, %v2459
  %2579 = vst.msk [vmem:[%s4 + $0x58] sm:$0xff] %vm2567, %v2464
  %2580 = vst.msk [vmem:[%s4 + $0x60] sm:$0xff] %vm2567, %v2469
  %2581 = vst.msk [vmem:[%s4 + $0x68] sm:$0xff] %vm2567, %v2474
  %2582 = vst.msk [vmem:[%s4 + $0x70] sm:$0xff] %vm2567, %v2479
  %2583 = vst.msk [vmem:[%s4 + $0x78] sm:$0xff] %vm2567, %v2484
  %2584 = vst.msk [vmem:[%s4 + $0x80] sm:$0xff] %vm2567, %v2489
  %2585 = vst.msk [vmem:[%s4 + $0x88] sm:$0xff] %vm2567, %v2494
  %2586 = vst.msk [vmem:[%s4 + $0x90] sm:$0xff] %vm2567, %v2499
  %2587 = vst.msk [vmem:[%s4 + $0x98] sm:$0xff] %vm2567, %v2504
  %2588 = vst.msk [vmem:[%s4 + $0xa0] sm:$0xff] %vm2567, %v2509
  %2589 = vst.msk [vmem:[%s4 + $0xa8] sm:$0xff] %vm2567, %v2514
  %2590 = vst.msk [vmem:[%s4 + $0xb0] sm:$0xff] %vm2567, %v2519
  %2591 = vst.msk [vmem:[%s4 + $0xb8] sm:$0xff] %vm2567, %v2524
  %2592 = vst.msk [vmem:[%s4 + $0xc0] sm:$0xff] %vm2567, %v2529
  %2593 = vst.msk [vmem:[%s4 + $0xc8] sm:$0xff] %vm2567, %v2534
  %2594 = vst.msk [vmem:[%s4 + $0xd0] sm:$0xff] %vm2567, %v2539
  %2595 = vst.msk [vmem:[%s4 + $0xd8] sm:$0xff] %vm2567, %v2544
  %2596 = vst.msk [vmem:[%s4 + $0xe0] sm:$0xff] %vm2567, %v2549
  %2597 = vst.msk [vmem:[%s4 + $0xe8] sm:$0xff] %vm2567, %v2554
  %2598 = vst.msk [vmem:[%s4 + $0xf0] sm:$0xff] %vm2567, %v2559
  %2599 = vst.msk [vmem:[%s4 + $0xf8] sm:$0xff] %vm2567, %v2564
  // Predicated region
  $region18: #{tpu_custom_call.1} parent=0 // pred_check
    _
  $region19: #{tpu_custom_call.1} parent=0 // pred_check_branch
    %2601 = sbr.rel (0) target = $region21
  $region20: #{tpu_custom_call.1} parent=0 // pred_region
    _
  $region21: #{tpu_custom_call.1} parent=0 // pred_fallthru
    _
  // Predicated region
  $region22: #{tpu_custom_call.1} parent=0 // pred_check
    _
  $region23: #{tpu_custom_call.1} parent=0 // pred_check_branch
    %2603 = sbr.rel (0) target = $region25
  $region24: #{tpu_custom_call.1} parent=0 // pred_region
    _
  $region25: #{tpu_custom_call.1} parent=0 // pred_fallthru
    _

</llo_original>
